<compile_context>
chip_gen: v7x
topology: tpu7x:2x2x1
jax: 0.10.0
libtpu: 0.0.40
codegen_flags: <defaults>
</compile_context>

<pallas_src>
from functools import partial

import jax
import jax.numpy as jnp
from jax.experimental import pallas as pl
from jax.experimental.pallas import tpu as pltpu


def _sepconv_kernel(x_ref, t_ref, o_ref, *, stride, kh, tile_h):
    """One (batch element, output-row tile) grid step.

    x_ref : (1, H_pad, W_pad*C)      padded image, (W_pad, C) flattened onto
                                     lanes; resident across row tiles
    t_ref : (KH, W_pad*C, W_out*O)   per-tap-row block-Toeplitz fused weights
    o_ref : (1, tile_h, W_out*O)     lane-dense output rows for this tile
    """
    n_lanes = t_ref.shape[-1]
    row0 = pl.multiple_of(pl.program_id(1) * (tile_h * stride),
                          tile_h * stride)

    # fp32 accumulator of the final (lane-dense) output tile only.
    acc = jnp.zeros((tile_h, n_lanes), jnp.float32)
    for i in range(kh):
        if stride == 1:
            xs = x_ref[0, pl.ds(row0 + i, tile_h), :]
        else:
            # stride > 1 (not exercised by the demo): contiguous read, then a
            # strided in-register row select (sublane select on the XLU).
            xs_full = x_ref[0, pl.ds(row0 + i, (tile_h - 1) * stride + 1), :]
            xs = jax.lax.slice(xs_full, (0, 0), xs_full.shape, (stride, 1))
        acc = acc + jnp.dot(
            xs,                       # (tile_h, W_pad*C)
            t_ref[i],                 # (W_pad*C, W_out*O)
            preferred_element_type=jnp.float32,
            precision=jax.lax.Precision.HIGHEST,
        )

    o_ref[0] = acc.astype(o_ref.dtype)


def _pick_tile_h(h_out, cap=64):
    """Output rows per grid step: largest multiple-of-8 divisor of h_out up to
    `cap` (keeps per-step VMEM bounded on big images); else the full extent
    (a full-extent block is always layout-legal)."""
    best = None
    for th in range(8, min(h_out, cap) + 1, 8):
        if h_out % th == 0:
            best = th
    return best if best is not None else h_out


def separable_conv2d(x_nchw, dw_weight, pw_weight, *, stride=1, padding=0):
    """x_nchw: (N, C, H, W); dw_weight: (C, KH, KW); pw_weight: (O, C)."""
    n, c, h, w = x_nchw.shape
    kh, kw = dw_weight.shape[1], dw_weight.shape[2]
    o = pw_weight.shape[0]

    hp, wp = h + 2 * padding, w + 2 * padding
    h_out = (hp - kh) // stride + 1
    w_out = (wp - kw) // stride + 1

    # Glue: NCHW -> NHWC, explicit zero pad, flatten (W_pad, C) onto lanes.
    x_nhwc = jnp.transpose(x_nchw, (0, 2, 3, 1))
    x_pad = jnp.pad(
        x_nhwc, ((0, 0), (padding, padding), (padding, padding), (0, 0)))
    x_flat = x_pad.reshape(n, hp, wp * c)

    # Fuse depthwise and pointwise weights: W[i, j, c, o] = dw[c, i, j] * pw[o, c].
    w_fused = (jnp.transpose(dw_weight, (1, 2, 0))[:, :, :, None]
               * jnp.transpose(pw_weight, (1, 0))[None, None, :, :])  # (KH,KW,C,O)

    # Per-tap-row block-Toeplitz matrices (tiny: KH x W_pad*C x W_out*O):
    #   T[i, wp*C + c, w*O + o] = W[i, wp - w*stride, c, o]  if 0 <= j < KW else 0
    wp_idx = jnp.arange(wp)
    w_idx = jnp.arange(w_out)
    j_off = wp_idx[:, None] - w_idx[None, :] * stride          # (W_pad, W_out)
    valid = (j_off >= 0) & (j_off < kw)
    t_mat = w_fused[:, jnp.clip(j_off, 0, kw - 1)]             # (KH,W_pad,W_out,C,O)
    t_mat = jnp.where(valid[None, :, :, None, None], t_mat, 0.0)
    t_mat = jnp.transpose(t_mat, (0, 1, 3, 2, 4)).reshape(kh, wp * c, w_out * o)
    t_mat = t_mat.astype(x_nchw.dtype)

    tile_h = _pick_tile_h(h_out)
    n_row_tiles = h_out // tile_h

    kernel = partial(_sepconv_kernel, stride=stride, kh=kh, tile_h=tile_h)

    out_flat = pl.pallas_call(
        kernel,
        out_shape=jax.ShapeDtypeStruct((n, h_out, w_out * o), x_nchw.dtype),
        grid_spec=pltpu.PrefetchScalarGridSpec(
            num_scalar_prefetch=0,
            grid=(n, n_row_tiles),
            in_specs=[
                # Full padded image per batch element; block index ignores the
                # row-tile axis so the image stays resident across row tiles.
                pl.BlockSpec((1, hp, wp * c), lambda b, t: (b, 0, 0)),
                # Fused Toeplitz weights, resident for the whole grid.
                pl.BlockSpec((kh, wp * c, w_out * o), lambda b, t: (0, 0, 0)),
            ],
            out_specs=pl.BlockSpec((1, tile_h, w_out * o),
                                   lambda b, t: (b, t, 0)),
        ),
        compiler_params=pltpu.CompilerParams(
            dimension_semantics=("parallel", "arbitrary")),
    )(x_flat, t_mat)

    # Glue: lane-dense rows -> NCHW to match the PyTorch output convention.
    out_nhwc = out_flat.reshape(n, h_out, w_out, o)
    return jnp.transpose(out_nhwc, (0, 3, 1, 2))


if __name__ == "__main__":
    # SeparableConv2d(in_channels=4, out_channels=8, kernel_size=3,
    #                 stride=1, padding=1, bias=False)
    N, C, H, W = 2, 4, 16, 16
    O, K = 8, 3
    STRIDE, PAD = 1, 1

    key = jax.random.PRNGKey(0)
    kx, kdw, kpw = jax.random.split(key, 3)
    x = jax.random.normal(kx, (N, C, H, W), jnp.float32)
    # deterministic synthetic weights (PyTorch shapes: (C,1,K,K) and (O,C,1,1))
    dw_weight = 0.1 * jax.random.normal(kdw, (C, K, K), jnp.float32)
    pw_weight = 0.1 * jax.random.normal(kpw, (O, C), jnp.float32)

    out = separable_conv2d(x, dw_weight, pw_weight, stride=STRIDE, padding=PAD)
    out = jax.block_until_ready(out)
    assert out.shape == (N, O, H, W), out.shape

    # Reference check against XLA convolutions (depthwise then pointwise).
    dw_ref = jax.lax.conv_general_dilated(
        x, dw_weight[:, None, :, :], (STRIDE, STRIDE),
        [(PAD, PAD), (PAD, PAD)],
        dimension_numbers=("NCHW", "OIHW", "NCHW"),
        feature_group_count=C,
        precision=jax.lax.Precision.HIGHEST)
    ref = jax.lax.conv_general_dilated(
        dw_ref, pw_weight[:, :, None, None], (1, 1), "VALID",
        dimension_numbers=("NCHW", "OIHW", "NCHW"),
        precision=jax.lax.Precision.HIGHEST)
    assert jnp.allclose(out, ref, atol=1e-4, rtol=1e-4), \
        float(jnp.max(jnp.abs(out - ref)))

    print("KERNEL_OK")
</pallas_src>

<mosaic_0001>
module attributes {stable_mosaic.version = 11 : i64} {
  func.func @_sepconv_kernel(%arg0: i32, %arg1: i32, %arg2: memref<1x18x72xf32, #tpu.memory_space<vmem>>, %arg3: memref<3x72x128xf32, #tpu.memory_space<vmem>>, %arg4: memref<1x16x128xf32, #tpu.memory_space<vmem>>) attributes {dimension_semantics = [#tpu.dimension_semantics<parallel>, #tpu.dimension_semantics<arbitrary>], iteration_bounds = array<i64: 2, 1>, scalar_prefetch = 0 : i64, scratch_operands = 0 : i64, tpu.core_type = #tpu.core_type<tc>, window_params = [{transform_indices = @transform_0, window_bounds = array<i64: 1, 18, 72>}, {pipeline_mode = #tpu.pipeline_mode<synchronous>, transform_indices = @transform_1, window_bounds = array<i64: 3, 72, 128>}, {transform_indices = @transform_2, window_bounds = array<i64: 1, 16, 128>}]} {
    %c16_i32 = arith.constant 16 : i32
    %0 = arith.muli %arg1, %c16_i32 : i32
    %1 = tpu.assume_multiple %0, 16 : i32
    %cst = arith.constant 0.000000e+00 : f32
    %2 = vector.broadcast %cst : f32 to vector<16x128xf32>
    %c0_i32 = arith.constant 0 : i32
    %3 = arith.addi %1, %c0_i32 : i32
    %c0 = arith.constant 0 : index
    %4 = arith.index_cast %3 : i32 to index
    %c0_0 = arith.constant 0 : index
    %5 = vector.load %arg2[%c0, %4, %c0_0] : memref<1x18x72xf32, #tpu.memory_space<vmem>>, vector<1x16x72xf32>
    %6 = vector.shape_cast %5 : vector<1x16x72xf32> to vector<16x72xf32>
    %c0_1 = arith.constant 0 : index
    %c0_2 = arith.constant 0 : index
    %c0_3 = arith.constant 0 : index
    %7 = vector.load %arg3[%c0_1, %c0_2, %c0_3] : memref<3x72x128xf32, #tpu.memory_space<vmem>>, vector<1x72x128xf32>
    %8 = vector.shape_cast %7 : vector<1x72x128xf32> to vector<72x128xf32>
    %cst_4 = arith.constant dense<0.000000e+00> : vector<16x128xf32>
    %9 = tpu.matmul %6, %8, %cst_4 {dimension_numbers = #tpu.dot_dimension_numbers<[1], [0], [0], [1], [0, 0, 1, 1], [], []>, precision = #tpu.contract_precision<fp32>} : vector<16x72xf32>, vector<72x128xf32>, vector<16x128xf32> -> vector<16x128xf32>
    %10 = arith.addf %2, %9 : vector<16x128xf32>
    %c1_i32 = arith.constant 1 : i32
    %11 = arith.addi %1, %c1_i32 : i32
    %c0_5 = arith.constant 0 : index
    %12 = arith.index_cast %11 : i32 to index
    %c0_6 = arith.constant 0 : index
    %13 = vector.load %arg2[%c0_5, %12, %c0_6] : memref<1x18x72xf32, #tpu.memory_space<vmem>>, vector<1x16x72xf32>
    %14 = vector.shape_cast %13 : vector<1x16x72xf32> to vector<16x72xf32>
    %c1 = arith.constant 1 : index
    %c0_7 = arith.constant 0 : index
    %c0_8 = arith.constant 0 : index
    %15 = vector.load %arg3[%c1, %c0_7, %c0_8] : memref<3x72x128xf32, #tpu.memory_space<vmem>>, vector<1x72x128xf32>
    %16 = vector.shape_cast %15 : vector<1x72x128xf32> to vector<72x128xf32>
    %cst_9 = arith.constant dense<0.000000e+00> : vector<16x128xf32>
    %17 = tpu.matmul %14, %16, %cst_9 {dimension_numbers = #tpu.dot_dimension_numbers<[1], [0], [0], [1], [0, 0, 1, 1], [], []>, precision = #tpu.contract_precision<fp32>} : vector<16x72xf32>, vector<72x128xf32>, vector<16x128xf32> -> vector<16x128xf32>
    %18 = arith.addf %10, %17 : vector<16x128xf32>
    %c2_i32 = arith.constant 2 : i32
    %19 = arith.addi %1, %c2_i32 : i32
    %c0_10 = arith.constant 0 : index
    %20 = arith.index_cast %19 : i32 to index
    %c0_11 = arith.constant 0 : index
    %21 = vector.load %arg2[%c0_10, %20, %c0_11] : memref<1x18x72xf32, #tpu.memory_space<vmem>>, vector<1x16x72xf32>
    %22 = vector.shape_cast %21 : vector<1x16x72xf32> to vector<16x72xf32>
    %c2 = arith.constant 2 : index
    %c0_12 = arith.constant 0 : index
    %c0_13 = arith.constant 0 : index
    %23 = vector.load %arg3[%c2, %c0_12, %c0_13] : memref<3x72x128xf32, #tpu.memory_space<vmem>>, vector<1x72x128xf32>
    %24 = vector.shape_cast %23 : vector<1x72x128xf32> to vector<72x128xf32>
    %cst_14 = arith.constant dense<0.000000e+00> : vector<16x128xf32>
    %25 = tpu.matmul %22, %24, %cst_14 {dimension_numbers = #tpu.dot_dimension_numbers<[1], [0], [0], [1], [0, 0, 1, 1], [], []>, precision = #tpu.contract_precision<fp32>} : vector<16x72xf32>, vector<72x128xf32>, vector<16x128xf32> -> vector<16x128xf32>
    %26 = arith.addf %18, %25 : vector<16x128xf32>
    %c0_15 = arith.constant 0 : index
    %c0_16 = arith.constant 0 : index
    %c0_17 = arith.constant 0 : index
    %27 = vector.load %arg4[%c0_15, %c0_16, %c0_17] : memref<1x16x128xf32, #tpu.memory_space<vmem>>, vector<1x16x128xf32>
    %28 = vector.shape_cast %27 : vector<1x16x128xf32> to vector<16x128xf32>
    %29 = vector.shape_cast %26 : vector<16x128xf32> to vector<1x16x128xf32>
    tpu.vector_store %arg4[%c0_15, %c0_16, %c0_17], %29 {strides = array<i32>} : memref<1x16x128xf32, #tpu.memory_space<vmem>>, vector<1x16x128xf32>,
    return
  }
  func.func @transform_0(%arg0: i32, %arg1: i32) -> (i32, i32, i32) {
    %c0_i32 = arith.constant 0 : i32
    %c0_i32_0 = arith.constant 0 : i32
    %c0_i32_1 = arith.constant 0 : i32
    return %arg0, %c0_i32, %c0_i32_0 : i32, i32, i32
  }
  func.func @transform_1(%arg0: i32, %arg1: i32) -> (i32, i32, i32) {
    %c0_i32 = arith.constant 0 : i32
    %c0_i32_0 = arith.constant 0 : i32
    %c0_i32_1 = arith.constant 0 : i32
    %c0_i32_2 = arith.constant 0 : i32
    return %c0_i32, %c0_i32_0, %c0_i32_1 : i32, i32, i32
  }
  func.func @transform_2(%arg0: i32, %arg1: i32) -> (i32, i32, i32) {
    %c0_i32 = arith.constant 0 : i32
    %c0_i32_0 = arith.constant 0 : i32
    return %arg0, %arg1, %c0_i32 : i32, i32, i32
  }
}

</mosaic_0001>

<llo_original>
// kernel: tpu_custom_call.1
$region0: #{tpu_custom_call.1}
  #allocation0 [shape = 'u32[]', space=smem, size = 0x4, offset = 0x4, fixed_abs, tag = 'smem constant byte address 0x4 - core index']
  #allocation1 [shape = 'u32[144,128]{1,0:T(1,128)}', space=vmem, size = 0x12000, scoped, tag = 'internal scratch']
  %s0 = inlined_call_operand.vmem [shape: f32[2,18,72], index: 0, kind: input, shape index: {}]
  %s1 = inlined_call_operand.hbm [shape: f32[3,72,128], index: 1, kind: input, shape index: {}]
  %s2 = inlined_call_operand.hbm [shape: f32[2,16,128], index: 2, kind: output, shape index: {}]
  %s3 = sld [smem:[#allocation0]]
  $region45: #{tpu_custom_call.1} parent=0
    _
  %s5 = ssub.s32 1, %s3
  %s6 = scalar_select 0, %s5, %s3
  $region1: #{tpu_custom_call.1} parent=0
    #allocation2 [shape = 'u8[110592]{0}', space=vmem, size = 0x1b000, scoped, tag = 'input window, operand 1, single buffered']
    #allocation3 [shape = 's32[2]{0}', space=sflag, size = 0x8, scoped, tag = 'scoped memory for tpu_custom_call.1']
    #allocation4 [shape = 's32[2]{0}', space=sflag, size = 0x8, scoped, tag = 'scoped memory for tpu_custom_call.1']
    #allocation5 [shape = 'u8[16384]{0}', space=vmem, size = 0x4000, scoped, tag = 'output window, operand 0']
    %7 = vsyncpa [#allocation3], 0
    %8 = vsyncpa [#allocation4], 0
    %s9 = scalar_lea.sflag [#allocation4], 1
    %10 = vsyncpa %s9, 0
    loop: start=0, step=1, limit=4
    $region2: #{tpu_custom_call.1} parent=1 // loop_pre_header
      _
    $region3: #{tpu_custom_call.1} parent=1 // loop_header
      %s12 = sphi 0, %s16
      %p13 = scmp.ge.s32.totalorder %s12, 4
      %s19 = sphi 0, %s31
      %s20 = sphi 0, %s27
      %s21 = sphi 0, %s19
      %s22 = sphi 0, %s20
      %s23 = sphi 0, %s21
      %s24 = sphi 0, %s22
      %s34 = sphi 0, %s36
      %s37 = sphi 0, %s34
      %s38 = sphi 0, %s37
      %s54 = sphi 0, %s38
      %s58 = sphi 0, %s58
      %s60 = sphi 0, %s58
      %s61 = sphi 0, %s60
      %s75 = sphi 0, %s61
      %s83 = sphi 0, %s85
      %s86 = sphi 0, %s83
      %s87 = sphi 0, %s86
      %s103 = sphi 0, %s87
    $region4: #{tpu_custom_call.1} parent=1 // loop_header_branch
      %15 = sbr.rel (%p13) target = $region8
    $region5: #{tpu_custom_call.1} parent=1 // loop_body
      %s17 = ssub.s32 %s12, 1
      %s18 = ssub.s32 %s12, 2
      %s25 = sadd.s32 1, %s20
      %p26 = scmp.ge.s32.totalorder %s25, 1
      %s27 = scalar_select %p26, 0, %s25
      %s28 = sadd.s32 1, %s19
      %s29 = scalar_select %p26, %s28, %s19
      %p30 = scmp.ge.s32.totalorder %s29, 2
      %s31 = scalar_select %p30, 0, %s29
      %s32 = ssub.s32 %s19, %s31
      %p33 = scmp.eq.s32.totalorder %s32, 0
      %s35 = sadd.s32 %s34, 1
      %s36 = scalar_select %p33, %s34, %s35
      %p39 = pneg %p33
      %p40 = scmp.eq.s32.totalorder %s12, 1
      %p41 = por %p39, %p40
      %p42 = scmp.ne.s32.totalorder %s34, %s37
      %p43 = scmp.eq.s32.totalorder %s12, 0
      %p44 = por %p42, %p43
      %p45 = scmp.ne.s32.totalorder %s34, %s37
      %p46 = scmp.eq.s32.totalorder %s17, 1
      %p47 = por %p45, %p46
      %p48 = scmp.ne.s32.totalorder %s37, %s38
      %p49 = scmp.eq.s32.totalorder %s17, 0
      %p50 = por %p48, %p49
      %p51 = scmp.ne.s32.totalorder %s37, %s38
      %p52 = scmp.eq.s32.totalorder %s18, 1
      %p53 = por %p51, %p52
      %p55 = scmp.ne.s32.totalorder %s38, %s54
      %p56 = scmp.eq.s32.totalorder %s18, 0
      %p57 = por %p55, %p56
      %s59 = sadd.s32 %s58, 1
      %p62 = scmp.eq.s32.totalorder %s12, 1
      %p63 = scmp.ne.s32.totalorder %s58, %s60
      %p64 = scmp.eq.s32.totalorder %s12, 0
      %p65 = por %p63, %p64
      %p66 = scmp.ne.s32.totalorder %s58, %s60
      %p67 = scmp.eq.s32.totalorder %s17, 1
      %p68 = por %p66, %p67
      %p69 = scmp.ne.s32.totalorder %s60, %s61
      %p70 = scmp.eq.s32.totalorder %s17, 0
      %p71 = por %p69, %p70
      %p72 = scmp.ne.s32.totalorder %s60, %s61
      %p73 = scmp.eq.s32.totalorder %s18, 1
      %p74 = por %p72, %p73
      %p76 = scmp.ne.s32.totalorder %s61, %s75
      %p77 = scmp.eq.s32.totalorder %s18, 0
      %p78 = por %p76, %p77
      %s79 = ssub.s32 %s19, %s31
      %s80 = ssub.s32 %s20, %s27
      %s81 = sor.u32 %s79, %s80
      %p82 = scmp.eq.s32.totalorder %s81, 0
      %s84 = sadd.s32 %s83, 1
      %s85 = scalar_select %p82, %s83, %s84
      %p88 = pneg %p82
      %p89 = scmp.eq.s32.totalorder %s12, 1
      %p90 = por %p88, %p89
      %p91 = scmp.ne.s32.totalorder %s83, %s86
      %p92 = scmp.eq.s32.totalorder %s12, 0
      %p93 = por %p91, %p92
      %p94 = scmp.ne.s32.totalorder %s83, %s86
      %p95 = scmp.eq.s32.totalorder %s17, 1
      %p96 = por %p94, %p95
      %p97 = scmp.ne.s32.totalorder %s86, %s87
      %p98 = scmp.eq.s32.totalorder %s17, 0
      %p99 = por %p97, %p98
      %p100 = scmp.ne.s32.totalorder %s86, %s87
      %p101 = scmp.eq.s32.totalorder %s18, 1
      %p102 = por %p100, %p101
      %p104 = scmp.ne.s32.totalorder %s87, %s103
      %p105 = scmp.eq.s32.totalorder %s18, 0
      %p106 = por %p104, %p105
      %p107 = scmp.le.s32.totalorder 1, %s12
      %p108 = scmp.lt.s32.totalorder %s12, 3
      %p109 = pnand %p107, %p108
      %p110 = pneg %p109
      // Predicated region
      $region9: #{tpu_custom_call.1} parent=5 // pred_check
        _
      $region10: #{tpu_custom_call.1} parent=5 // pred_check_branch
        %112 = sbr.rel (%p109) target = $region12
      $region11: #{tpu_custom_call.1} parent=5 // pred_region
        %s113 = ssub.s32 %s12, 1
        // Predicated region
        $region13: #{tpu_custom_call.1} parent=11 // pred_check
          %p114 = pneg %p71
        $region14: #{tpu_custom_call.1} parent=11 // pred_check_branch
          %116 = sbr.rel (%p114) target = $region16
        $region15: #{tpu_custom_call.1} parent=11 // pred_region
          %s118 = ssub.s32 3456, 3456
          %119 = vsyncadd [#allocation3], %s118
          %s120 = sshll.u32 [#allocation2], 4
          %s121 = int_to_ptr.vmem [resolvable:$true] %s120
          %126 = dma.hbm_to_vmem [thread:$0]  %s1, 3456, %s121, [#allocation3], 128, 128, 8
        $region16: #{tpu_custom_call.1} parent=11 // pred_fallthru
          _
      $region12: #{tpu_custom_call.1} parent=5 // pred_fallthru
        _
      %p127 = scmp.lt.s32.totalorder %s12, 2
      // Predicated region
      $region17: #{tpu_custom_call.1} parent=5 // pred_check
        %p128 = pneg %p127
      $region18: #{tpu_custom_call.1} parent=5 // pred_check_branch
        %130 = sbr.rel (%p128) target = $region20
      $region19: #{tpu_custom_call.1} parent=5 // pred_region
        // Predicated region
        $region21: #{tpu_custom_call.1} parent=19 // pred_check
          %p131 = pneg %p44
        $region22: #{tpu_custom_call.1} parent=19 // pred_check_branch
          %133 = sbr.rel (%p131) target = $region24
        $region23: #{tpu_custom_call.1} parent=19 // pred_region
          %p134 = scmp.lt.s32.totalorder %s19, 1
          %s135 = scalar_select %p134, %s19, 1
          %s136 = smul.addr %s135, 3
          %s137 = smul.addr %s136, 8
          %s138 = scalar_lea.vmem %s0, %s137
        $region24: #{tpu_custom_call.1} parent=19 // pred_fallthru
          _
      $region20: #{tpu_custom_call.1} parent=5 // pred_fallthru
        _
      %p139 = scmp.le.s32.totalorder 1, %s12
      %p140 = scmp.lt.s32.totalorder %s12, 3
      %p141 = pnand %p139, %p140
      %p142 = pneg %p141
      // Predicated region
      $region25: #{tpu_custom_call.1} parent=5 // pred_check
        _
      $region26: #{tpu_custom_call.1} parent=5 // pred_check_branch
        %144 = sbr.rel (%p141) target = $region28
      $region27: #{tpu_custom_call.1} parent=5 // pred_region
        %s145 = ssub.s32 %s12, 1
        // Predicated region
        $region29: #{tpu_custom_call.1} parent=27 // pred_check
          %p146 = pneg %p71
        $region30: #{tpu_custom_call.1} parent=27 // pred_check_branch
          %148 = sbr.rel (%p146) target = $region32
        $region31: #{tpu_custom_call.1} parent=27 // pred_region
          %149 = dma.done [#allocation3], 3456
        $region32: #{tpu_custom_call.1} parent=27 // pred_fallthru
          _
        %p150 = scmp.lt.s32.totalorder %s21, 1
        %s151 = scalar_select %p150, %s21, 1
        %s152 = smul.addr %s151, 3
        %s153 = smul.addr %s152, 8
        %s154 = scalar_lea.vmem %s0, %s153
        %p155 = pneg %p50
        %p156 = pneg %p47
        %p157 = pneg %p71
        %p158 = pneg %p68
        %p159 = pneg %p99
        %p160 = pneg %p96
        %s161 = sand.u32 %s86, 1
        %s162 = scalar_lea.sflag [#allocation4], %s161
        %s163 = sand.u32 %s86, 1
        %s164 = smul.addr %s163, 16
        %s165 = scalar_lea.vmem [#allocation5], %s164
        %p166 = scmp.lt.s32.totalorder %s21, 1
        %s167 = scalar_select %p166, %s21, 1
        %s168 = smul.addr %s167, 3
        %s169 = smul.addr %s168, 8
        %s170 = scalar_lea.vmem %s0, %s169
        %s171 = smul.u32 2, %s22
        %s172 = smul.u32 %s22, 16
        %s173 = scalar_lea.vmem %s170, %s172
        %v174 = vld [vmem:[%s173] sm:$0xff]
        %v175 = vld [vmem:[%s173 + $0x8] sm:$0xff]
        %v176 = vld [vmem:[#allocation2] sm:$0xff]
        %v177 = vld [vmem:[#allocation2 + $0x8] sm:$0xff]
        %v178 = vld [vmem:[#allocation2 + $0x10] sm:$0xff]
        %v179 = vld [vmem:[#allocation2 + $0x18] sm:$0xff]
        %v180 = vld [vmem:[#allocation2 + $0x20] sm:$0xff]
        %v181 = vld [vmem:[#allocation2 + $0x28] sm:$0xff]
        %v182 = vld [vmem:[#allocation2 + $0x30] sm:$0xff]
        %v183 = vld [vmem:[#allocation2 + $0x38] sm:$0xff]
        %v184 = vld [vmem:[#allocation2 + $0x40] sm:$0xff]
        %s185 = sadd.s32 %s172, 1
        %s186 = scalar_lea.vmem %s170, %s185
        %v187 = vld [vmem:[%s186] sm:$0xff]
        %v188 = vld [vmem:[%s186 + $0x8] sm:$0xff]
        %s189 = scalar_lea.vmem [#allocation2], 72
        %v190 = vld [vmem:[%s189] sm:$0xff]
        %v191 = vld [vmem:[%s189 + $0x8] sm:$0xff]
        %v192 = vld [vmem:[%s189 + $0x10] sm:$0xff]
        %v193 = vld [vmem:[%s189 + $0x18] sm:$0xff]
        %v194 = vld [vmem:[%s189 + $0x20] sm:$0xff]
        %v195 = vld [vmem:[%s189 + $0x28] sm:$0xff]
        %v196 = vld [vmem:[%s189 + $0x30] sm:$0xff]
        %v197 = vld [vmem:[%s189 + $0x38] sm:$0xff]
        %v198 = vld [vmem:[%s189 + $0x40] sm:$0xff]
        %vm199 = vcmask 588800
        %v201 = vsel %vm199, %v187, 0
        %v204 = vsel %vm199, %v188, 0
        %206 = vmatprep.subr.mxu0 0.0
        %v207 = vand.u32 %v190, 4294901760
        %208 = vmatpush1.msra.mxu0 %v207
        %209 = vmatprep.subr.mxu0 0.0
        %v210 = vand.u32 %v191, 4294901760
        %211 = vmatpush1.msra.mxu0 %v210
        %212 = vmatprep.subr.mxu0 0.0
        %v213 = vand.u32 %v192, 4294901760
        %214 = vmatpush1.msra.mxu0 %v213
        %215 = vmatprep.subr.mxu0 0.0
        %v216 = vand.u32 %v193, 4294901760
        %217 = vmatpush1.msra.mxu0 %v216
        %218 = vmatprep.subr.mxu0 0.0
        %v219 = vand.u32 %v194, 4294901760
        %220 = vmatpush1.msra.mxu0 %v219
        %221 = vmatprep.subr.mxu0 0.0
        %v222 = vand.u32 %v195, 4294901760
        %223 = vmatpush1.msra.mxu0 %v222
        %224 = vmatprep.subr.mxu0 0.0
        %v225 = vand.u32 %v196, 4294901760
        %226 = vmatpush1.msra.mxu0 %v225
        %227 = vmatprep.subr.mxu0 0.0
        %v228 = vand.u32 %v197, 4294901760
        %229 = vmatpush1.msra.mxu0 %v228
        %230 = vmatprep.subr.mxu0 0.0
        %v231 = vand.u32 %v198, 4294901760
        %232 = vmatpush1.msra.mxu0 %v231
        %233 = vmatprep.subr.mxu0 0.0
        %234 = vmatpush1.msra.mxu0 0.0
        %235 = vmatprep.subr.mxu0 0.0
        %236 = vmatpush1.msra.mxu0 0.0
        %237 = vmatprep.subr.mxu0 0.0
        %238 = vmatpush1.msra.mxu0 0.0
        %239 = vmatprep.subr.mxu0 0.0
        %240 = vmatpush1.msra.mxu0 0.0
        %241 = vmatprep.subr.mxu0 0.0
        %242 = vmatpush1.msra.mxu0 0.0
        %243 = vmatprep.subr.mxu0 0.0
        %244 = vmatpush1.msra.mxu0 0.0
        %245 = vmatprep.subr.mxu0 0.0
        %246 = vmatpush1.msra.mxu0 0.0
        %247 = vmatprep.subr.mxu0 0.0
        %248 = vmatpush1.msra.mxu0 0.0
        %249 = vmatprep.subr.mxu0 0.0
        %250 = vmatpush1.msra.mxu0 0.0
        %251 = vmatprep.subr.mxu0 0.0
        %252 = vmatpush1.msra.mxu0 0.0
        %253 = vmatprep.subr.mxu0 0.0
        %254 = vmatpush1.msra.mxu0 0.0
        %255 = vmatprep.subr.mxu0 0.0
        %256 = vmatpush1.msra.mxu0 0.0
        %257 = vmatprep.subr.mxu0 0.0
        %258 = vmatpush1.msra.mxu0 0.0
        %259 = vmatprep.subr.mxu0 0.0
        %260 = vmatpush1.msra.mxu0 0.0
        %261 = vmatprep.subr.mxu0 0.0
        %262 = vmatpush1.msra.mxu0 0.0
        %263 = vmatprep.subr.mxu0 0.0
        %264 = vmatpush1.msra.mxu0 0.0
        %265 = vmatprep.subr.mxu0 0.0
        %266 = vmatpush1.msra.mxu0 0.0
        %267 = vmatprep.subr.mxu0 0.0
        %268 = vmatpush1.msra.mxu0 0.0
        %269 = vmatprep.subr.mxu0 0.0
        %270 = vmatpush1.msra.mxu0 0.0
        %271 = vmatprep.subr.mxu0 0.0
        %272 = vmatpush1.msra.mxu0 0.0
        %273 = vmatprep.subr.mxu0 0.0
        %274 = vmatpush1.msra.mxu0 0.0
        %275 = vmatprep.subr.mxu0 0.0
        %276 = vmatpush1.msra.mxu0 0.0
        %277 = vmatprep.subr.mxu0 0.0
        %278 = vmatpush1.msra.mxu0 0.0
        %279 = vmatprep.mubr.f32.mxu0 0.0
        %v280 = vand.u32 %v201, 4294901760
        %v281 = vsub.f32 %v201, %v280
        %v282 = vand.u32 %v281, 4294901760
        %v283 = vsub.f32 %v281, %v282
        %v284 = vand.u32 %v283, 4294901760
        %285 = vmatmul.mubr.f32.gmra.mrb[0].mxu0 %v284
        %v286 = vpop.f32.mrb[0].mxu0
        %v287 = vadd.f32 0.0, %v286
        %v288 = vpop.f32.mrb[0].mxu0
        %289 = vmatprep.mubr.f32.mxu0 0.0
        %v290 = vand.u32 %v204, 4294901760
        %v291 = vsub.f32 %v204, %v290
        %v292 = vand.u32 %v291, 4294901760
        %v293 = vsub.f32 %v291, %v292
        %v294 = vand.u32 %v293, 4294901760
        %295 = vmatmul.mubr.f32.gmra.mrb[0].mxu0 %v294
        %v296 = vpop.f32.mrb[0].mxu0
        %v297 = vadd.f32 0.0, %v296
        %v298 = vpop.f32.mrb[0].mxu0
        %299 = vdwg.mxu0
        %300 = vmatprep.subr.mxu0 0.0
        %v301 = vand.u32 %v190, 4294901760
        %v302 = vsub.f32 %v190, %v301
        %v303 = vand.u32 %v302, 4294901760
        %v304 = vsub.f32 %v302, %v303
        %v305 = vand.u32 %v304, 4294901760
        %306 = vmatpush1.msra.mxu0 %v305
        %307 = vmatprep.subr.mxu0 0.0
        %v308 = vand.u32 %v191, 4294901760
        %v309 = vsub.f32 %v191, %v308
        %v310 = vand.u32 %v309, 4294901760
        %v311 = vsub.f32 %v309, %v310
        %v312 = vand.u32 %v311, 4294901760
        %313 = vmatpush1.msra.mxu0 %v312
        %314 = vmatprep.subr.mxu0 0.0
        %v315 = vand.u32 %v192, 4294901760
        %v316 = vsub.f32 %v192, %v315
        %v317 = vand.u32 %v316, 4294901760
        %v318 = vsub.f32 %v316, %v317
        %v319 = vand.u32 %v318, 4294901760
        %320 = vmatpush1.msra.mxu0 %v319
        %321 = vmatprep.subr.mxu0 0.0
        %v322 = vand.u32 %v193, 4294901760
        %v323 = vsub.f32 %v193, %v322
        %v324 = vand.u32 %v323, 4294901760
        %v325 = vsub.f32 %v323, %v324
        %v326 = vand.u32 %v325, 4294901760
        %327 = vmatpush1.msra.mxu0 %v326
        %328 = vmatprep.subr.mxu0 0.0
        %v329 = vand.u32 %v194, 4294901760
        %v330 = vsub.f32 %v194, %v329
        %v331 = vand.u32 %v330, 4294901760
        %v332 = vsub.f32 %v330, %v331
        %v333 = vand.u32 %v332, 4294901760
        %334 = vmatpush1.msra.mxu0 %v333
        %335 = vmatprep.subr.mxu0 0.0
        %v336 = vand.u32 %v195, 4294901760
        %v337 = vsub.f32 %v195, %v336
        %v338 = vand.u32 %v337, 4294901760
        %v339 = vsub.f32 %v337, %v338
        %v340 = vand.u32 %v339, 4294901760
        %341 = vmatpush1.msra.mxu0 %v340
        %342 = vmatprep.subr.mxu0 0.0
        %v343 = vand.u32 %v196, 4294901760
        %v344 = vsub.f32 %v196, %v343
        %v345 = vand.u32 %v344, 4294901760
        %v346 = vsub.f32 %v344, %v345
        %v347 = vand.u32 %v346, 4294901760
        %348 = vmatpush1.msra.mxu0 %v347
        %349 = vmatprep.subr.mxu0 0.0
        %v350 = vand.u32 %v197, 4294901760
        %v351 = vsub.f32 %v197, %v350
        %v352 = vand.u32 %v351, 4294901760
        %v353 = vsub.f32 %v351, %v352
        %v354 = vand.u32 %v353, 4294901760
        %355 = vmatpush1.msra.mxu0 %v354
        %356 = vmatprep.subr.mxu0 0.0
        %v357 = vand.u32 %v198, 4294901760
        %v358 = vsub.f32 %v198, %v357
        %v359 = vand.u32 %v358, 4294901760
        %v360 = vsub.f32 %v358, %v359
        %v361 = vand.u32 %v360, 4294901760
        %362 = vmatpush1.msra.mxu0 %v361
        %363 = vmatprep.subr.mxu0 0.0
        %364 = vmatpush1.msra.mxu0 0.0
        %365 = vmatprep.subr.mxu0 0.0
        %366 = vmatpush1.msra.mxu0 0.0
        %367 = vmatprep.subr.mxu0 0.0
        %368 = vmatpush1.msra.mxu0 0.0
        %369 = vmatprep.subr.mxu0 0.0
        %370 = vmatpush1.msra.mxu0 0.0
        %371 = vmatprep.subr.mxu0 0.0
        %372 = vmatpush1.msra.mxu0 0.0
        %373 = vmatprep.subr.mxu0 0.0
        %374 = vmatpush1.msra.mxu0 0.0
        %375 = vmatprep.subr.mxu0 0.0
        %376 = vmatpush1.msra.mxu0 0.0
        %377 = vmatprep.subr.mxu0 0.0
        %378 = vmatpush1.msra.mxu0 0.0
        %379 = vmatprep.subr.mxu0 0.0
        %380 = vmatpush1.msra.mxu0 0.0
        %381 = vmatprep.subr.mxu0 0.0
        %382 = vmatpush1.msra.mxu0 0.0
        %383 = vmatprep.subr.mxu0 0.0
        %384 = vmatpush1.msra.mxu0 0.0
        %385 = vmatprep.subr.mxu0 0.0
        %386 = vmatpush1.msra.mxu0 0.0
        %387 = vmatprep.subr.mxu0 0.0
        %388 = vmatpush1.msra.mxu0 0.0
        %389 = vmatprep.subr.mxu0 0.0
        %390 = vmatpush1.msra.mxu0 0.0
        %391 = vmatprep.subr.mxu0 0.0
        %392 = vmatpush1.msra.mxu0 0.0
        %393 = vmatprep.subr.mxu0 0.0
        %394 = vmatpush1.msra.mxu0 0.0
        %395 = vmatprep.subr.mxu0 0.0
        %396 = vmatpush1.msra.mxu0 0.0
        %397 = vmatprep.subr.mxu0 0.0
        %398 = vmatpush1.msra.mxu0 0.0
        %399 = vmatprep.subr.mxu0 0.0
        %400 = vmatpush1.msra.mxu0 0.0
        %401 = vmatprep.subr.mxu0 0.0
        %402 = vmatpush1.msra.mxu0 0.0
        %403 = vmatprep.subr.mxu0 0.0
        %404 = vmatpush1.msra.mxu0 0.0
        %405 = vmatprep.subr.mxu0 0.0
        %406 = vmatpush1.msra.mxu0 0.0
        %407 = vmatprep.subr.mxu0 0.0
        %408 = vmatpush1.msra.mxu0 0.0
        %409 = vmatprep.mubr.f32.mxu0 0.0
        %v410 = vand.u32 %v201, 4294901760
        %411 = vmatmul.mubr.f32.gmra.mrb[0].mxu0 %v410
        %v412 = vpop.f32.mrb[0].mxu0
        %v413 = vadd.f32 %v287, %v412
        %v414 = vpop.f32.mrb[0].mxu0
        %415 = vmatprep.mubr.f32.mxu0 0.0
        %v416 = vand.u32 %v204, 4294901760
        %417 = vmatmul.mubr.f32.gmra.mrb[0].mxu0 %v416
        %v418 = vpop.f32.mrb[0].mxu0
        %v419 = vadd.f32 %v297, %v418
        %v420 = vpop.f32.mrb[0].mxu0
        %421 = vdwg.mxu0
        %422 = vmatprep.subr.mxu0 0.0
        %v423 = vand.u32 %v190, 4294901760
        %v424 = vsub.f32 %v190, %v423
        %425 = vmatpush1.msra.mxu0 %v424
        %426 = vmatprep.subr.mxu0 0.0
        %v427 = vand.u32 %v191, 4294901760
        %v428 = vsub.f32 %v191, %v427
        %429 = vmatpush1.msra.mxu0 %v428
        %430 = vmatprep.subr.mxu0 0.0
        %v431 = vand.u32 %v192, 4294901760
        %v432 = vsub.f32 %v192, %v431
        %433 = vmatpush1.msra.mxu0 %v432
        %434 = vmatprep.subr.mxu0 0.0
        %v435 = vand.u32 %v193, 4294901760
        %v436 = vsub.f32 %v193, %v435
        %437 = vmatpush1.msra.mxu0 %v436
        %438 = vmatprep.subr.mxu0 0.0
        %v439 = vand.u32 %v194, 4294901760
        %v440 = vsub.f32 %v194, %v439
        %441 = vmatpush1.msra.mxu0 %v440
        %442 = vmatprep.subr.mxu0 0.0
        %v443 = vand.u32 %v195, 4294901760
        %v444 = vsub.f32 %v195, %v443
        %445 = vmatpush1.msra.mxu0 %v444
        %446 = vmatprep.subr.mxu0 0.0
        %v447 = vand.u32 %v196, 4294901760
        %v448 = vsub.f32 %v196, %v447
        %449 = vmatpush1.msra.mxu0 %v448
        %450 = vmatprep.subr.mxu0 0.0
        %v451 = vand.u32 %v197, 4294901760
        %v452 = vsub.f32 %v197, %v451
        %453 = vmatpush1.msra.mxu0 %v452
        %454 = vmatprep.subr.mxu0 0.0
        %v455 = vand.u32 %v198, 4294901760
        %v456 = vsub.f32 %v198, %v455
        %457 = vmatpush1.msra.mxu0 %v456
        %458 = vmatprep.subr.mxu0 0.0
        %459 = vmatpush1.msra.mxu0 0.0
        %460 = vmatprep.subr.mxu0 0.0
        %461 = vmatpush1.msra.mxu0 0.0
        %462 = vmatprep.subr.mxu0 0.0
        %463 = vmatpush1.msra.mxu0 0.0
        %464 = vmatprep.subr.mxu0 0.0
        %465 = vmatpush1.msra.mxu0 0.0
        %466 = vmatprep.subr.mxu0 0.0
        %467 = vmatpush1.msra.mxu0 0.0
        %468 = vmatprep.subr.mxu0 0.0
        %469 = vmatpush1.msra.mxu0 0.0
        %470 = vmatprep.subr.mxu0 0.0
        %471 = vmatpush1.msra.mxu0 0.0
        %472 = vmatprep.subr.mxu0 0.0
        %473 = vmatpush1.msra.mxu0 0.0
        %474 = vmatprep.subr.mxu0 0.0
        %475 = vmatpush1.msra.mxu0 0.0
        %476 = vmatprep.subr.mxu0 0.0
        %477 = vmatpush1.msra.mxu0 0.0
        %478 = vmatprep.subr.mxu0 0.0
        %479 = vmatpush1.msra.mxu0 0.0
        %480 = vmatprep.subr.mxu0 0.0
        %481 = vmatpush1.msra.mxu0 0.0
        %482 = vmatprep.subr.mxu0 0.0
        %483 = vmatpush1.msra.mxu0 0.0
        %484 = vmatprep.subr.mxu0 0.0
        %485 = vmatpush1.msra.mxu0 0.0
        %486 = vmatprep.subr.mxu0 0.0
        %487 = vmatpush1.msra.mxu0 0.0
        %488 = vmatprep.subr.mxu0 0.0
        %489 = vmatpush1.msra.mxu0 0.0
        %490 = vmatprep.subr.mxu0 0.0
        %491 = vmatpush1.msra.mxu0 0.0
        %492 = vmatprep.subr.mxu0 0.0
        %493 = vmatpush1.msra.mxu0 0.0
        %494 = vmatprep.subr.mxu0 0.0
        %495 = vmatpush1.msra.mxu0 0.0
        %496 = vmatprep.subr.mxu0 0.0
        %497 = vmatpush1.msra.mxu0 0.0
        %498 = vmatprep.subr.mxu0 0.0
        %499 = vmatpush1.msra.mxu0 0.0
        %500 = vmatprep.subr.mxu0 0.0
        %501 = vmatpush1.msra.mxu0 0.0
        %502 = vmatprep.subr.mxu0 0.0
        %503 = vmatpush1.msra.mxu0 0.0
        %504 = vmatprep.mubr.f32.mxu0 0.0
        %v505 = vand.u32 %v201, 4294901760
        %v506 = vsub.f32 %v201, %v505
        %507 = vmatmul.mubr.f32.gmra.mrb[0].mxu0 %v506
        %v508 = vpop.f32.mrb[0].mxu0
        %v509 = vadd.f32 %v413, %v508
        %v510 = vpop.f32.mrb[0].mxu0
        %511 = vmatprep.mubr.f32.mxu0 0.0
        %v512 = vand.u32 %v204, 4294901760
        %v513 = vsub.f32 %v204, %v512
        %514 = vmatmul.mubr.f32.gmra.mrb[0].mxu0 %v513
        %v515 = vpop.f32.mrb[0].mxu0
        %v516 = vadd.f32 %v419, %v515
        %v517 = vpop.f32.mrb[0].mxu0
        %518 = vdwg.mxu0
        %519 = vmatprep.subr.mxu0 0.0
        %v520 = vand.u32 %v190, 4294901760
        %521 = vmatpush1.msra.mxu0 %v520
        %522 = vmatprep.subr.mxu0 0.0
        %v523 = vand.u32 %v191, 4294901760
        %524 = vmatpush1.msra.mxu0 %v523
        %525 = vmatprep.subr.mxu0 0.0
        %v526 = vand.u32 %v192, 4294901760
        %527 = vmatpush1.msra.mxu0 %v526
        %528 = vmatprep.subr.mxu0 0.0
        %v529 = vand.u32 %v193, 4294901760
        %530 = vmatpush1.msra.mxu0 %v529
        %531 = vmatprep.subr.mxu0 0.0
        %v532 = vand.u32 %v194, 4294901760
        %533 = vmatpush1.msra.mxu0 %v532
        %534 = vmatprep.subr.mxu0 0.0
        %v535 = vand.u32 %v195, 4294901760
        %536 = vmatpush1.msra.mxu0 %v535
        %537 = vmatprep.subr.mxu0 0.0
        %v538 = vand.u32 %v196, 4294901760
        %539 = vmatpush1.msra.mxu0 %v538
        %540 = vmatprep.subr.mxu0 0.0
        %v541 = vand.u32 %v197, 4294901760
        %542 = vmatpush1.msra.mxu0 %v541
        %543 = vmatprep.subr.mxu0 0.0
        %v544 = vand.u32 %v198, 4294901760
        %545 = vmatpush1.msra.mxu0 %v544
        %546 = vmatprep.subr.mxu0 0.0
        %547 = vmatpush1.msra.mxu0 0.0
        %548 = vmatprep.subr.mxu0 0.0
        %549 = vmatpush1.msra.mxu0 0.0
        %550 = vmatprep.subr.mxu0 0.0
        %551 = vmatpush1.msra.mxu0 0.0
        %552 = vmatprep.subr.mxu0 0.0
        %553 = vmatpush1.msra.mxu0 0.0
        %554 = vmatprep.subr.mxu0 0.0
        %555 = vmatpush1.msra.mxu0 0.0
        %556 = vmatprep.subr.mxu0 0.0
        %557 = vmatpush1.msra.mxu0 0.0
        %558 = vmatprep.subr.mxu0 0.0
        %559 = vmatpush1.msra.mxu0 0.0
        %560 = vmatprep.subr.mxu0 0.0
        %561 = vmatpush1.msra.mxu0 0.0
        %562 = vmatprep.subr.mxu0 0.0
        %563 = vmatpush1.msra.mxu0 0.0
        %564 = vmatprep.subr.mxu0 0.0
        %565 = vmatpush1.msra.mxu0 0.0
        %566 = vmatprep.subr.mxu0 0.0
        %567 = vmatpush1.msra.mxu0 0.0
        %568 = vmatprep.subr.mxu0 0.0
        %569 = vmatpush1.msra.mxu0 0.0
        %570 = vmatprep.subr.mxu0 0.0
        %571 = vmatpush1.msra.mxu0 0.0
        %572 = vmatprep.subr.mxu0 0.0
        %573 = vmatpush1.msra.mxu0 0.0
        %574 = vmatprep.subr.mxu0 0.0
        %575 = vmatpush1.msra.mxu0 0.0
        %576 = vmatprep.subr.mxu0 0.0
        %577 = vmatpush1.msra.mxu0 0.0
        %578 = vmatprep.subr.mxu0 0.0
        %579 = vmatpush1.msra.mxu0 0.0
        %580 = vmatprep.subr.mxu0 0.0
        %581 = vmatpush1.msra.mxu0 0.0
        %582 = vmatprep.subr.mxu0 0.0
        %583 = vmatpush1.msra.mxu0 0.0
        %584 = vmatprep.subr.mxu0 0.0
        %585 = vmatpush1.msra.mxu0 0.0
        %586 = vmatprep.subr.mxu0 0.0
        %587 = vmatpush1.msra.mxu0 0.0
        %588 = vmatprep.subr.mxu0 0.0
        %589 = vmatpush1.msra.mxu0 0.0
        %590 = vmatprep.subr.mxu0 0.0
        %591 = vmatpush1.msra.mxu0 0.0
        %592 = vmatprep.mubr.f32.mxu0 0.0
        %v593 = vand.u32 %v201, 4294901760
        %v594 = vsub.f32 %v201, %v593
        %v595 = vand.u32 %v594, 4294901760
        %596 = vmatmul.mubr.f32.gmra.mrb[0].mxu0 %v595
        %v597 = vpop.f32.mrb[0].mxu0
        %v598 = vadd.f32 %v509, %v597
        %v599 = vpop.f32.mrb[0].mxu0
        %600 = vmatprep.mubr.f32.mxu0 0.0
        %v601 = vand.u32 %v204, 4294901760
        %v602 = vsub.f32 %v204, %v601
        %v603 = vand.u32 %v602, 4294901760
        %604 = vmatmul.mubr.f32.gmra.mrb[0].mxu0 %v603
        %v605 = vpop.f32.mrb[0].mxu0
        %v606 = vadd.f32 %v516, %v605
        %v607 = vpop.f32.mrb[0].mxu0
        %608 = vdwg.mxu0
        %609 = vmatprep.subr.mxu0 0.0
        %v610 = vand.u32 %v190, 4294901760
        %v611 = vsub.f32 %v190, %v610
        %v612 = vand.u32 %v611, 4294901760
        %613 = vmatpush1.msra.mxu0 %v612
        %614 = vmatprep.subr.mxu0 0.0
        %v615 = vand.u32 %v191, 4294901760
        %v616 = vsub.f32 %v191, %v615
        %v617 = vand.u32 %v616, 4294901760
        %618 = vmatpush1.msra.mxu0 %v617
        %619 = vmatprep.subr.mxu0 0.0
        %v620 = vand.u32 %v192, 4294901760
        %v621 = vsub.f32 %v192, %v620
        %v622 = vand.u32 %v621, 4294901760
        %623 = vmatpush1.msra.mxu0 %v622
        %624 = vmatprep.subr.mxu0 0.0
        %v625 = vand.u32 %v193, 4294901760
        %v626 = vsub.f32 %v193, %v625
        %v627 = vand.u32 %v626, 4294901760
        %628 = vmatpush1.msra.mxu0 %v627
        %629 = vmatprep.subr.mxu0 0.0
        %v630 = vand.u32 %v194, 4294901760
        %v631 = vsub.f32 %v194, %v630
        %v632 = vand.u32 %v631, 4294901760
        %633 = vmatpush1.msra.mxu0 %v632
        %634 = vmatprep.subr.mxu0 0.0
        %v635 = vand.u32 %v195, 4294901760
        %v636 = vsub.f32 %v195, %v635
        %v637 = vand.u32 %v636, 4294901760
        %638 = vmatpush1.msra.mxu0 %v637
        %639 = vmatprep.subr.mxu0 0.0
        %v640 = vand.u32 %v196, 4294901760
        %v641 = vsub.f32 %v196, %v640
        %v642 = vand.u32 %v641, 4294901760
        %643 = vmatpush1.msra.mxu0 %v642
        %644 = vmatprep.subr.mxu0 0.0
        %v645 = vand.u32 %v197, 4294901760
        %v646 = vsub.f32 %v197, %v645
        %v647 = vand.u32 %v646, 4294901760
        %648 = vmatpush1.msra.mxu0 %v647
        %649 = vmatprep.subr.mxu0 0.0
        %v650 = vand.u32 %v198, 4294901760
        %v651 = vsub.f32 %v198, %v650
        %v652 = vand.u32 %v651, 4294901760
        %653 = vmatpush1.msra.mxu0 %v652
        %654 = vmatprep.subr.mxu0 0.0
        %655 = vmatpush1.msra.mxu0 0.0
        %656 = vmatprep.subr.mxu0 0.0
        %657 = vmatpush1.msra.mxu0 0.0
        %658 = vmatprep.subr.mxu0 0.0
        %659 = vmatpush1.msra.mxu0 0.0
        %660 = vmatprep.subr.mxu0 0.0
        %661 = vmatpush1.msra.mxu0 0.0
        %662 = vmatprep.subr.mxu0 0.0
        %663 = vmatpush1.msra.mxu0 0.0
        %664 = vmatprep.subr.mxu0 0.0
        %665 = vmatpush1.msra.mxu0 0.0
        %666 = vmatprep.subr.mxu0 0.0
        %667 = vmatpush1.msra.mxu0 0.0
        %668 = vmatprep.subr.mxu0 0.0
        %669 = vmatpush1.msra.mxu0 0.0
        %670 = vmatprep.subr.mxu0 0.0
        %671 = vmatpush1.msra.mxu0 0.0
        %672 = vmatprep.subr.mxu0 0.0
        %673 = vmatpush1.msra.mxu0 0.0
        %674 = vmatprep.subr.mxu0 0.0
        %675 = vmatpush1.msra.mxu0 0.0
        %676 = vmatprep.subr.mxu0 0.0
        %677 = vmatpush1.msra.mxu0 0.0
        %678 = vmatprep.subr.mxu0 0.0
        %679 = vmatpush1.msra.mxu0 0.0
        %680 = vmatprep.subr.mxu0 0.0
        %681 = vmatpush1.msra.mxu0 0.0
        %682 = vmatprep.subr.mxu0 0.0
        %683 = vmatpush1.msra.mxu0 0.0
        %684 = vmatprep.subr.mxu0 0.0
        %685 = vmatpush1.msra.mxu0 0.0
        %686 = vmatprep.subr.mxu0 0.0
        %687 = vmatpush1.msra.mxu0 0.0
        %688 = vmatprep.subr.mxu0 0.0
        %689 = vmatpush1.msra.mxu0 0.0
        %690 = vmatprep.subr.mxu0 0.0
        %691 = vmatpush1.msra.mxu0 0.0
        %692 = vmatprep.subr.mxu0 0.0
        %693 = vmatpush1.msra.mxu0 0.0
        %694 = vmatprep.subr.mxu0 0.0
        %695 = vmatpush1.msra.mxu0 0.0
        %696 = vmatprep.subr.mxu0 0.0
        %697 = vmatpush1.msra.mxu0 0.0
        %698 = vmatprep.subr.mxu0 0.0
        %699 = vmatpush1.msra.mxu0 0.0
        %700 = vmatprep.mubr.f32.mxu0 0.0
        %v701 = vand.u32 %v201, 4294901760
        %702 = vmatmul.mubr.f32.gmra.mrb[0].mxu0 %v701
        %v703 = vpop.f32.mrb[0].mxu0
        %v704 = vadd.f32 %v598, %v703
        %v705 = vpop.f32.mrb[0].mxu0
        %706 = vmatprep.mubr.f32.mxu0 0.0
        %v707 = vand.u32 %v204, 4294901760
        %708 = vmatmul.mubr.f32.gmra.mrb[0].mxu0 %v707
        %v709 = vpop.f32.mrb[0].mxu0
        %v710 = vadd.f32 %v606, %v709
        %v711 = vpop.f32.mrb[0].mxu0
        %712 = vdwg.mxu0
        %713 = vmatprep.subr.mxu0 0.0
        %v714 = vand.u32 %v190, 4294901760
        %715 = vmatpush1.msra.mxu0 %v714
        %716 = vmatprep.subr.mxu0 0.0
        %v717 = vand.u32 %v191, 4294901760
        %718 = vmatpush1.msra.mxu0 %v717
        %719 = vmatprep.subr.mxu0 0.0
        %v720 = vand.u32 %v192, 4294901760
        %721 = vmatpush1.msra.mxu0 %v720
        %722 = vmatprep.subr.mxu0 0.0
        %v723 = vand.u32 %v193, 4294901760
        %724 = vmatpush1.msra.mxu0 %v723
        %725 = vmatprep.subr.mxu0 0.0
        %v726 = vand.u32 %v194, 4294901760
        %727 = vmatpush1.msra.mxu0 %v726
        %728 = vmatprep.subr.mxu0 0.0
        %v729 = vand.u32 %v195, 4294901760
        %730 = vmatpush1.msra.mxu0 %v729
        %731 = vmatprep.subr.mxu0 0.0
        %v732 = vand.u32 %v196, 4294901760
        %733 = vmatpush1.msra.mxu0 %v732
        %734 = vmatprep.subr.mxu0 0.0
        %v735 = vand.u32 %v197, 4294901760
        %736 = vmatpush1.msra.mxu0 %v735
        %737 = vmatprep.subr.mxu0 0.0
        %v738 = vand.u32 %v198, 4294901760
        %739 = vmatpush1.msra.mxu0 %v738
        %740 = vmatprep.subr.mxu0 0.0
        %741 = vmatpush1.msra.mxu0 0.0
        %742 = vmatprep.subr.mxu0 0.0
        %743 = vmatpush1.msra.mxu0 0.0
        %744 = vmatprep.subr.mxu0 0.0
        %745 = vmatpush1.msra.mxu0 0.0
        %746 = vmatprep.subr.mxu0 0.0
        %747 = vmatpush1.msra.mxu0 0.0
        %748 = vmatprep.subr.mxu0 0.0
        %749 = vmatpush1.msra.mxu0 0.0
        %750 = vmatprep.subr.mxu0 0.0
        %751 = vmatpush1.msra.mxu0 0.0
        %752 = vmatprep.subr.mxu0 0.0
        %753 = vmatpush1.msra.mxu0 0.0
        %754 = vmatprep.subr.mxu0 0.0
        %755 = vmatpush1.msra.mxu0 0.0
        %756 = vmatprep.subr.mxu0 0.0
        %757 = vmatpush1.msra.mxu0 0.0
        %758 = vmatprep.subr.mxu0 0.0
        %759 = vmatpush1.msra.mxu0 0.0
        %760 = vmatprep.subr.mxu0 0.0
        %761 = vmatpush1.msra.mxu0 0.0
        %762 = vmatprep.subr.mxu0 0.0
        %763 = vmatpush1.msra.mxu0 0.0
        %764 = vmatprep.subr.mxu0 0.0
        %765 = vmatpush1.msra.mxu0 0.0
        %766 = vmatprep.subr.mxu0 0.0
        %767 = vmatpush1.msra.mxu0 0.0
        %768 = vmatprep.subr.mxu0 0.0
        %769 = vmatpush1.msra.mxu0 0.0
        %770 = vmatprep.subr.mxu0 0.0
        %771 = vmatpush1.msra.mxu0 0.0
        %772 = vmatprep.subr.mxu0 0.0
        %773 = vmatpush1.msra.mxu0 0.0
        %774 = vmatprep.subr.mxu0 0.0
        %775 = vmatpush1.msra.mxu0 0.0
        %776 = vmatprep.subr.mxu0 0.0
        %777 = vmatpush1.msra.mxu0 0.0
        %778 = vmatprep.subr.mxu0 0.0
        %779 = vmatpush1.msra.mxu0 0.0
        %780 = vmatprep.subr.mxu0 0.0
        %781 = vmatpush1.msra.mxu0 0.0
        %782 = vmatprep.subr.mxu0 0.0
        %783 = vmatpush1.msra.mxu0 0.0
        %784 = vmatprep.subr.mxu0 0.0
        %785 = vmatpush1.msra.mxu0 0.0
        %786 = vmatprep.mubr.f32.mxu0 0.0
        %v787 = vand.u32 %v201, 4294901760
        %788 = vmatmul.mubr.f32.gmra.mrb[0].mxu0 %v787
        %v789 = vpop.f32.mrb[0].mxu0
        %v790 = vadd.f32 %v704, %v789
        %v791 = vpop.f32.mrb[0].mxu0
        %792 = vmatprep.mubr.f32.mxu0 0.0
        %v793 = vand.u32 %v204, 4294901760
        %794 = vmatmul.mubr.f32.gmra.mrb[0].mxu0 %v793
        %v795 = vpop.f32.mrb[0].mxu0
        %v796 = vadd.f32 %v710, %v795
        %v797 = vpop.f32.mrb[0].mxu0
        %798 = vdwg.mxu0
        %v800 = vsel %vm199, %v174, 0
        %v803 = vsel %vm199, %v175, 0
        %805 = vmatprep.subr.mxu0 0.0
        %v806 = vand.u32 %v176, 4294901760
        %807 = vmatpush1.msra.mxu0 %v806
        %808 = vmatprep.subr.mxu0 0.0
        %v809 = vand.u32 %v177, 4294901760
        %810 = vmatpush1.msra.mxu0 %v809
        %811 = vmatprep.subr.mxu0 0.0
        %v812 = vand.u32 %v178, 4294901760
        %813 = vmatpush1.msra.mxu0 %v812
        %814 = vmatprep.subr.mxu0 0.0
        %v815 = vand.u32 %v179, 4294901760
        %816 = vmatpush1.msra.mxu0 %v815
        %817 = vmatprep.subr.mxu0 0.0
        %v818 = vand.u32 %v180, 4294901760
        %819 = vmatpush1.msra.mxu0 %v818
        %820 = vmatprep.subr.mxu0 0.0
        %v821 = vand.u32 %v181, 4294901760
        %822 = vmatpush1.msra.mxu0 %v821
        %823 = vmatprep.subr.mxu0 0.0
        %v824 = vand.u32 %v182, 4294901760
        %825 = vmatpush1.msra.mxu0 %v824
        %826 = vmatprep.subr.mxu0 0.0
        %v827 = vand.u32 %v183, 4294901760
        %828 = vmatpush1.msra.mxu0 %v827
        %829 = vmatprep.subr.mxu0 0.0
        %v830 = vand.u32 %v184, 4294901760
        %831 = vmatpush1.msra.mxu0 %v830
        %832 = vmatprep.subr.mxu0 0.0
        %833 = vmatpush1.msra.mxu0 0.0
        %834 = vmatprep.subr.mxu0 0.0
        %835 = vmatpush1.msra.mxu0 0.0
        %836 = vmatprep.subr.mxu0 0.0
        %837 = vmatpush1.msra.mxu0 0.0
        %838 = vmatprep.subr.mxu0 0.0
        %839 = vmatpush1.msra.mxu0 0.0
        %840 = vmatprep.subr.mxu0 0.0
        %841 = vmatpush1.msra.mxu0 0.0
        %842 = vmatprep.subr.mxu0 0.0
        %843 = vmatpush1.msra.mxu0 0.0
        %844 = vmatprep.subr.mxu0 0.0
        %845 = vmatpush1.msra.mxu0 0.0
        %846 = vmatprep.subr.mxu0 0.0
        %847 = vmatpush1.msra.mxu0 0.0
        %848 = vmatprep.subr.mxu0 0.0
        %849 = vmatpush1.msra.mxu0 0.0
        %850 = vmatprep.subr.mxu0 0.0
        %851 = vmatpush1.msra.mxu0 0.0
        %852 = vmatprep.subr.mxu0 0.0
        %853 = vmatpush1.msra.mxu0 0.0
        %854 = vmatprep.subr.mxu0 0.0
        %855 = vmatpush1.msra.mxu0 0.0
        %856 = vmatprep.subr.mxu0 0.0
        %857 = vmatpush1.msra.mxu0 0.0
        %858 = vmatprep.subr.mxu0 0.0
        %859 = vmatpush1.msra.mxu0 0.0
        %860 = vmatprep.subr.mxu0 0.0
        %861 = vmatpush1.msra.mxu0 0.0
        %862 = vmatprep.subr.mxu0 0.0
        %863 = vmatpush1.msra.mxu0 0.0
        %864 = vmatprep.subr.mxu0 0.0
        %865 = vmatpush1.msra.mxu0 0.0
        %866 = vmatprep.subr.mxu0 0.0
        %867 = vmatpush1.msra.mxu0 0.0
        %868 = vmatprep.subr.mxu0 0.0
        %869 = vmatpush1.msra.mxu0 0.0
        %870 = vmatprep.subr.mxu0 0.0
        %871 = vmatpush1.msra.mxu0 0.0
        %872 = vmatprep.subr.mxu0 0.0
        %873 = vmatpush1.msra.mxu0 0.0
        %874 = vmatprep.subr.mxu0 0.0
        %875 = vmatpush1.msra.mxu0 0.0
        %876 = vmatprep.subr.mxu0 0.0
        %877 = vmatpush1.msra.mxu0 0.0
        %878 = vmatprep.mubr.f32.mxu0 0.0
        %v879 = vand.u32 %v800, 4294901760
        %v880 = vsub.f32 %v800, %v879
        %v881 = vand.u32 %v880, 4294901760
        %v882 = vsub.f32 %v880, %v881
        %v883 = vand.u32 %v882, 4294901760
        %884 = vmatmul.mubr.f32.gmra.mrb[0].mxu0 %v883
        %v885 = vpop.f32.mrb[0].mxu0
        %v886 = vadd.f32 %v790, %v885
        %v887 = vpop.f32.mrb[0].mxu0
        %888 = vmatprep.mubr.f32.mxu0 0.0
        %v889 = vand.u32 %v803, 4294901760
        %v890 = vsub.f32 %v803, %v889
        %v891 = vand.u32 %v890, 4294901760
        %v892 = vsub.f32 %v890, %v891
        %v893 = vand.u32 %v892, 4294901760
        %894 = vmatmul.mubr.f32.gmra.mrb[0].mxu0 %v893
        %v895 = vpop.f32.mrb[0].mxu0
        %v896 = vadd.f32 %v796, %v895
        %v897 = vpop.f32.mrb[0].mxu0
        %898 = vdwg.mxu0
        %899 = vmatprep.subr.mxu0 0.0
        %v900 = vand.u32 %v176, 4294901760
        %v901 = vsub.f32 %v176, %v900
        %v902 = vand.u32 %v901, 4294901760
        %v903 = vsub.f32 %v901, %v902
        %v904 = vand.u32 %v903, 4294901760
        %905 = vmatpush1.msra.mxu0 %v904
        %906 = vmatprep.subr.mxu0 0.0
        %v907 = vand.u32 %v177, 4294901760
        %v908 = vsub.f32 %v177, %v907
        %v909 = vand.u32 %v908, 4294901760
        %v910 = vsub.f32 %v908, %v909
        %v911 = vand.u32 %v910, 4294901760
        %912 = vmatpush1.msra.mxu0 %v911
        %913 = vmatprep.subr.mxu0 0.0
        %v914 = vand.u32 %v178, 4294901760
        %v915 = vsub.f32 %v178, %v914
        %v916 = vand.u32 %v915, 4294901760
        %v917 = vsub.f32 %v915, %v916
        %v918 = vand.u32 %v917, 4294901760
        %919 = vmatpush1.msra.mxu0 %v918
        %920 = vmatprep.subr.mxu0 0.0
        %v921 = vand.u32 %v179, 4294901760
        %v922 = vsub.f32 %v179, %v921
        %v923 = vand.u32 %v922, 4294901760
        %v924 = vsub.f32 %v922, %v923
        %v925 = vand.u32 %v924, 4294901760
        %926 = vmatpush1.msra.mxu0 %v925
        %927 = vmatprep.subr.mxu0 0.0
        %v928 = vand.u32 %v180, 4294901760
        %v929 = vsub.f32 %v180, %v928
        %v930 = vand.u32 %v929, 4294901760
        %v931 = vsub.f32 %v929, %v930
        %v932 = vand.u32 %v931, 4294901760
        %933 = vmatpush1.msra.mxu0 %v932
        %934 = vmatprep.subr.mxu0 0.0
        %v935 = vand.u32 %v181, 4294901760
        %v936 = vsub.f32 %v181, %v935
        %v937 = vand.u32 %v936, 4294901760
        %v938 = vsub.f32 %v936, %v937
        %v939 = vand.u32 %v938, 4294901760
        %940 = vmatpush1.msra.mxu0 %v939
        %941 = vmatprep.subr.mxu0 0.0
        %v942 = vand.u32 %v182, 4294901760
        %v943 = vsub.f32 %v182, %v942
        %v944 = vand.u32 %v943, 4294901760
        %v945 = vsub.f32 %v943, %v944
        %v946 = vand.u32 %v945, 4294901760
        %947 = vmatpush1.msra.mxu0 %v946
        %948 = vmatprep.subr.mxu0 0.0
        %v949 = vand.u32 %v183, 4294901760
        %v950 = vsub.f32 %v183, %v949
        %v951 = vand.u32 %v950, 4294901760
        %v952 = vsub.f32 %v950, %v951
        %v953 = vand.u32 %v952, 4294901760
        %954 = vmatpush1.msra.mxu0 %v953
        %955 = vmatprep.subr.mxu0 0.0
        %v956 = vand.u32 %v184, 4294901760
        %v957 = vsub.f32 %v184, %v956
        %v958 = vand.u32 %v957, 4294901760
        %v959 = vsub.f32 %v957, %v958
        %v960 = vand.u32 %v959, 4294901760
        %961 = vmatpush1.msra.mxu0 %v960
        %962 = vmatprep.subr.mxu0 0.0
        %963 = vmatpush1.msra.mxu0 0.0
        %964 = vmatprep.subr.mxu0 0.0
        %965 = vmatpush1.msra.mxu0 0.0
        %966 = vmatprep.subr.mxu0 0.0
        %967 = vmatpush1.msra.mxu0 0.0
        %968 = vmatprep.subr.mxu0 0.0
        %969 = vmatpush1.msra.mxu0 0.0
        %970 = vmatprep.subr.mxu0 0.0
        %971 = vmatpush1.msra.mxu0 0.0
        %972 = vmatprep.subr.mxu0 0.0
        %973 = vmatpush1.msra.mxu0 0.0
        %974 = vmatprep.subr.mxu0 0.0
        %975 = vmatpush1.msra.mxu0 0.0
        %976 = vmatprep.subr.mxu0 0.0
        %977 = vmatpush1.msra.mxu0 0.0
        %978 = vmatprep.subr.mxu0 0.0
        %979 = vmatpush1.msra.mxu0 0.0
        %980 = vmatprep.subr.mxu0 0.0
        %981 = vmatpush1.msra.mxu0 0.0
        %982 = vmatprep.subr.mxu0 0.0
        %983 = vmatpush1.msra.mxu0 0.0
        %984 = vmatprep.subr.mxu0 0.0
        %985 = vmatpush1.msra.mxu0 0.0
        %986 = vmatprep.subr.mxu0 0.0
        %987 = vmatpush1.msra.mxu0 0.0
        %988 = vmatprep.subr.mxu0 0.0
        %989 = vmatpush1.msra.mxu0 0.0
        %990 = vmatprep.subr.mxu0 0.0
        %991 = vmatpush1.msra.mxu0 0.0
        %992 = vmatprep.subr.mxu0 0.0
        %993 = vmatpush1.msra.mxu0 0.0
        %994 = vmatprep.subr.mxu0 0.0
        %995 = vmatpush1.msra.mxu0 0.0
        %996 = vmatprep.subr.mxu0 0.0
        %997 = vmatpush1.msra.mxu0 0.0
        %998 = vmatprep.subr.mxu0 0.0
        %999 = vmatpush1.msra.mxu0 0.0
        %1000 = vmatprep.subr.mxu0 0.0
        %1001 = vmatpush1.msra.mxu0 0.0
        %1002 = vmatprep.subr.mxu0 0.0
        %1003 = vmatpush1.msra.mxu0 0.0
        %1004 = vmatprep.subr.mxu0 0.0
        %1005 = vmatpush1.msra.mxu0 0.0
        %1006 = vmatprep.subr.mxu0 0.0
        %1007 = vmatpush1.msra.mxu0 0.0
        %1008 = vmatprep.mubr.f32.mxu0 0.0
        %v1009 = vand.u32 %v800, 4294901760
        %1010 = vmatmul.mubr.f32.gmra.mrb[0].mxu0 %v1009
        %v1011 = vpop.f32.mrb[0].mxu0
        %v1012 = vadd.f32 %v886, %v1011
        %v1013 = vpop.f32.mrb[0].mxu0
        %1014 = vmatprep.mubr.f32.mxu0 0.0
        %v1015 = vand.u32 %v803, 4294901760
        %1016 = vmatmul.mubr.f32.gmra.mrb[0].mxu0 %v1015
        %v1017 = vpop.f32.mrb[0].mxu0
        %v1018 = vadd.f32 %v896, %v1017
        %v1019 = vpop.f32.mrb[0].mxu0
        %1020 = vdwg.mxu0
        %1021 = vmatprep.subr.mxu0 0.0
        %v1022 = vand.u32 %v176, 4294901760
        %v1023 = vsub.f32 %v176, %v1022
        %1024 = vmatpush1.msra.mxu0 %v1023
        %1025 = vmatprep.subr.mxu0 0.0
        %v1026 = vand.u32 %v177, 4294901760
        %v1027 = vsub.f32 %v177, %v1026
        %1028 = vmatpush1.msra.mxu0 %v1027
        %1029 = vmatprep.subr.mxu0 0.0
        %v1030 = vand.u32 %v178, 4294901760
        %v1031 = vsub.f32 %v178, %v1030
        %1032 = vmatpush1.msra.mxu0 %v1031
        %1033 = vmatprep.subr.mxu0 0.0
        %v1034 = vand.u32 %v179, 4294901760
        %v1035 = vsub.f32 %v179, %v1034
        %1036 = vmatpush1.msra.mxu0 %v1035
        %1037 = vmatprep.subr.mxu0 0.0
        %v1038 = vand.u32 %v180, 4294901760
        %v1039 = vsub.f32 %v180, %v1038
        %1040 = vmatpush1.msra.mxu0 %v1039
        %1041 = vmatprep.subr.mxu0 0.0
        %v1042 = vand.u32 %v181, 4294901760
        %v1043 = vsub.f32 %v181, %v1042
        %1044 = vmatpush1.msra.mxu0 %v1043
        %1045 = vmatprep.subr.mxu0 0.0
        %v1046 = vand.u32 %v182, 4294901760
        %v1047 = vsub.f32 %v182, %v1046
        %1048 = vmatpush1.msra.mxu0 %v1047
        %1049 = vmatprep.subr.mxu0 0.0
        %v1050 = vand.u32 %v183, 4294901760
        %v1051 = vsub.f32 %v183, %v1050
        %1052 = vmatpush1.msra.mxu0 %v1051
        %1053 = vmatprep.subr.mxu0 0.0
        %v1054 = vand.u32 %v184, 4294901760
        %v1055 = vsub.f32 %v184, %v1054
        %1056 = vmatpush1.msra.mxu0 %v1055
        %1057 = vmatprep.subr.mxu0 0.0
        %1058 = vmatpush1.msra.mxu0 0.0
        %1059 = vmatprep.subr.mxu0 0.0
        %1060 = vmatpush1.msra.mxu0 0.0
        %1061 = vmatprep.subr.mxu0 0.0
        %1062 = vmatpush1.msra.mxu0 0.0
        %1063 = vmatprep.subr.mxu0 0.0
        %1064 = vmatpush1.msra.mxu0 0.0
        %1065 = vmatprep.subr.mxu0 0.0
        %1066 = vmatpush1.msra.mxu0 0.0
        %1067 = vmatprep.subr.mxu0 0.0
        %1068 = vmatpush1.msra.mxu0 0.0
        %1069 = vmatprep.subr.mxu0 0.0
        %1070 = vmatpush1.msra.mxu0 0.0
        %1071 = vmatprep.subr.mxu0 0.0
        %1072 = vmatpush1.msra.mxu0 0.0
        %1073 = vmatprep.subr.mxu0 0.0
        %1074 = vmatpush1.msra.mxu0 0.0
        %1075 = vmatprep.subr.mxu0 0.0
        %1076 = vmatpush1.msra.mxu0 0.0
        %1077 = vmatprep.subr.mxu0 0.0
        %1078 = vmatpush1.msra.mxu0 0.0
        %1079 = vmatprep.subr.mxu0 0.0
        %1080 = vmatpush1.msra.mxu0 0.0
        %1081 = vmatprep.subr.mxu0 0.0
        %1082 = vmatpush1.msra.mxu0 0.0
        %1083 = vmatprep.subr.mxu0 0.0
        %1084 = vmatpush1.msra.mxu0 0.0
        %1085 = vmatprep.subr.mxu0 0.0
        %1086 = vmatpush1.msra.mxu0 0.0
        %1087 = vmatprep.subr.mxu0 0.0
        %1088 = vmatpush1.msra.mxu0 0.0
        %1089 = vmatprep.subr.mxu0 0.0
        %1090 = vmatpush1.msra.mxu0 0.0
        %1091 = vmatprep.subr.mxu0 0.0
        %1092 = vmatpush1.msra.mxu0 0.0
        %1093 = vmatprep.subr.mxu0 0.0
        %1094 = vmatpush1.msra.mxu0 0.0
        %1095 = vmatprep.subr.mxu0 0.0
        %1096 = vmatpush1.msra.mxu0 0.0
        %1097 = vmatprep.subr.mxu0 0.0
        %1098 = vmatpush1.msra.mxu0 0.0
        %1099 = vmatprep.subr.mxu0 0.0
        %1100 = vmatpush1.msra.mxu0 0.0
        %1101 = vmatprep.subr.mxu0 0.0
        %1102 = vmatpush1.msra.mxu0 0.0
        %1103 = vmatprep.mubr.f32.mxu0 0.0
        %v1104 = vand.u32 %v800, 4294901760
        %v1105 = vsub.f32 %v800, %v1104
        %1106 = vmatmul.mubr.f32.gmra.mrb[0].mxu0 %v1105
        %v1107 = vpop.f32.mrb[0].mxu0
        %v1108 = vadd.f32 %v1012, %v1107
        %v1109 = vpop.f32.mrb[0].mxu0
        %1110 = vmatprep.mubr.f32.mxu0 0.0
        %v1111 = vand.u32 %v803, 4294901760
        %v1112 = vsub.f32 %v803, %v1111
        %1113 = vmatmul.mubr.f32.gmra.mrb[0].mxu0 %v1112
        %v1114 = vpop.f32.mrb[0].mxu0
        %v1115 = vadd.f32 %v1018, %v1114
        %v1116 = vpop.f32.mrb[0].mxu0
        %1117 = vdwg.mxu0
        %1118 = vmatprep.subr.mxu0 0.0
        %v1119 = vand.u32 %v176, 4294901760
        %1120 = vmatpush1.msra.mxu0 %v1119
        %1121 = vmatprep.subr.mxu0 0.0
        %v1122 = vand.u32 %v177, 4294901760
        %1123 = vmatpush1.msra.mxu0 %v1122
        %1124 = vmatprep.subr.mxu0 0.0
        %v1125 = vand.u32 %v178, 4294901760
        %1126 = vmatpush1.msra.mxu0 %v1125
        %1127 = vmatprep.subr.mxu0 0.0
        %v1128 = vand.u32 %v179, 4294901760
        %1129 = vmatpush1.msra.mxu0 %v1128
        %1130 = vmatprep.subr.mxu0 0.0
        %v1131 = vand.u32 %v180, 4294901760
        %1132 = vmatpush1.msra.mxu0 %v1131
        %1133 = vmatprep.subr.mxu0 0.0
        %v1134 = vand.u32 %v181, 4294901760
        %1135 = vmatpush1.msra.mxu0 %v1134
        %1136 = vmatprep.subr.mxu0 0.0
        %v1137 = vand.u32 %v182, 4294901760
        %1138 = vmatpush1.msra.mxu0 %v1137
        %1139 = vmatprep.subr.mxu0 0.0
        %v1140 = vand.u32 %v183, 4294901760
        %1141 = vmatpush1.msra.mxu0 %v1140
        %1142 = vmatprep.subr.mxu0 0.0
        %v1143 = vand.u32 %v184, 4294901760
        %1144 = vmatpush1.msra.mxu0 %v1143
        %1145 = vmatprep.subr.mxu0 0.0
        %1146 = vmatpush1.msra.mxu0 0.0
        %1147 = vmatprep.subr.mxu0 0.0
        %1148 = vmatpush1.msra.mxu0 0.0
        %1149 = vmatprep.subr.mxu0 0.0
        %1150 = vmatpush1.msra.mxu0 0.0
        %1151 = vmatprep.subr.mxu0 0.0
        %1152 = vmatpush1.msra.mxu0 0.0
        %1153 = vmatprep.subr.mxu0 0.0
        %1154 = vmatpush1.msra.mxu0 0.0
        %1155 = vmatprep.subr.mxu0 0.0
        %1156 = vmatpush1.msra.mxu0 0.0
        %1157 = vmatprep.subr.mxu0 0.0
        %1158 = vmatpush1.msra.mxu0 0.0
        %1159 = vmatprep.subr.mxu0 0.0
        %1160 = vmatpush1.msra.mxu0 0.0
        %1161 = vmatprep.subr.mxu0 0.0
        %1162 = vmatpush1.msra.mxu0 0.0
        %1163 = vmatprep.subr.mxu0 0.0
        %1164 = vmatpush1.msra.mxu0 0.0
        %1165 = vmatprep.subr.mxu0 0.0
        %1166 = vmatpush1.msra.mxu0 0.0
        %1167 = vmatprep.subr.mxu0 0.0
        %1168 = vmatpush1.msra.mxu0 0.0
        %1169 = vmatprep.subr.mxu0 0.0
        %1170 = vmatpush1.msra.mxu0 0.0
        %1171 = vmatprep.subr.mxu0 0.0
        %1172 = vmatpush1.msra.mxu0 0.0
        %1173 = vmatprep.subr.mxu0 0.0
        %1174 = vmatpush1.msra.mxu0 0.0
        %1175 = vmatprep.subr.mxu0 0.0
        %1176 = vmatpush1.msra.mxu0 0.0
        %1177 = vmatprep.subr.mxu0 0.0
        %1178 = vmatpush1.msra.mxu0 0.0
        %1179 = vmatprep.subr.mxu0 0.0
        %1180 = vmatpush1.msra.mxu0 0.0
        %1181 = vmatprep.subr.mxu0 0.0
        %1182 = vmatpush1.msra.mxu0 0.0
        %1183 = vmatprep.subr.mxu0 0.0
        %1184 = vmatpush1.msra.mxu0 0.0
        %1185 = vmatprep.subr.mxu0 0.0
        %1186 = vmatpush1.msra.mxu0 0.0
        %1187 = vmatprep.subr.mxu0 0.0
        %1188 = vmatpush1.msra.mxu0 0.0
        %1189 = vmatprep.subr.mxu0 0.0
        %1190 = vmatpush1.msra.mxu0 0.0
        %1191 = vmatprep.mubr.f32.mxu0 0.0
        %v1192 = vand.u32 %v800, 4294901760
        %v1193 = vsub.f32 %v800, %v1192
        %v1194 = vand.u32 %v1193, 4294901760
        %1195 = vmatmul.mubr.f32.gmra.mrb[0].mxu0 %v1194
        %v1196 = vpop.f32.mrb[0].mxu0
        %v1197 = vadd.f32 %v1108, %v1196
        %v1198 = vpop.f32.mrb[0].mxu0
        %1199 = vmatprep.mubr.f32.mxu0 0.0
        %v1200 = vand.u32 %v803, 4294901760
        %v1201 = vsub.f32 %v803, %v1200
        %v1202 = vand.u32 %v1201, 4294901760
        %1203 = vmatmul.mubr.f32.gmra.mrb[0].mxu0 %v1202
        %v1204 = vpop.f32.mrb[0].mxu0
        %v1205 = vadd.f32 %v1115, %v1204
        %v1206 = vpop.f32.mrb[0].mxu0
        %1207 = vdwg.mxu0
        %1208 = vmatprep.subr.mxu0 0.0
        %v1209 = vand.u32 %v176, 4294901760
        %v1210 = vsub.f32 %v176, %v1209
        %v1211 = vand.u32 %v1210, 4294901760
        %1212 = vmatpush1.msra.mxu0 %v1211
        %1213 = vmatprep.subr.mxu0 0.0
        %v1214 = vand.u32 %v177, 4294901760
        %v1215 = vsub.f32 %v177, %v1214
        %v1216 = vand.u32 %v1215, 4294901760
        %1217 = vmatpush1.msra.mxu0 %v1216
        %1218 = vmatprep.subr.mxu0 0.0
        %v1219 = vand.u32 %v178, 4294901760
        %v1220 = vsub.f32 %v178, %v1219
        %v1221 = vand.u32 %v1220, 4294901760
        %1222 = vmatpush1.msra.mxu0 %v1221
        %1223 = vmatprep.subr.mxu0 0.0
        %v1224 = vand.u32 %v179, 4294901760
        %v1225 = vsub.f32 %v179, %v1224
        %v1226 = vand.u32 %v1225, 4294901760
        %1227 = vmatpush1.msra.mxu0 %v1226
        %1228 = vmatprep.subr.mxu0 0.0
        %v1229 = vand.u32 %v180, 4294901760
        %v1230 = vsub.f32 %v180, %v1229
        %v1231 = vand.u32 %v1230, 4294901760
        %1232 = vmatpush1.msra.mxu0 %v1231
        %1233 = vmatprep.subr.mxu0 0.0
        %v1234 = vand.u32 %v181, 4294901760
        %v1235 = vsub.f32 %v181, %v1234
        %v1236 = vand.u32 %v1235, 4294901760
        %1237 = vmatpush1.msra.mxu0 %v1236
        %1238 = vmatprep.subr.mxu0 0.0
        %v1239 = vand.u32 %v182, 4294901760
        %v1240 = vsub.f32 %v182, %v1239
        %v1241 = vand.u32 %v1240, 4294901760
        %1242 = vmatpush1.msra.mxu0 %v1241
        %1243 = vmatprep.subr.mxu0 0.0
        %v1244 = vand.u32 %v183, 4294901760
        %v1245 = vsub.f32 %v183, %v1244
        %v1246 = vand.u32 %v1245, 4294901760
        %1247 = vmatpush1.msra.mxu0 %v1246
        %1248 = vmatprep.subr.mxu0 0.0
        %v1249 = vand.u32 %v184, 4294901760
        %v1250 = vsub.f32 %v184, %v1249
        %v1251 = vand.u32 %v1250, 4294901760
        %1252 = vmatpush1.msra.mxu0 %v1251
        %1253 = vmatprep.subr.mxu0 0.0
        %1254 = vmatpush1.msra.mxu0 0.0
        %1255 = vmatprep.subr.mxu0 0.0
        %1256 = vmatpush1.msra.mxu0 0.0
        %1257 = vmatprep.subr.mxu0 0.0
        %1258 = vmatpush1.msra.mxu0 0.0
        %1259 = vmatprep.subr.mxu0 0.0
        %1260 = vmatpush1.msra.mxu0 0.0
        %1261 = vmatprep.subr.mxu0 0.0
        %1262 = vmatpush1.msra.mxu0 0.0
        %1263 = vmatprep.subr.mxu0 0.0
        %1264 = vmatpush1.msra.mxu0 0.0
        %1265 = vmatprep.subr.mxu0 0.0
        %1266 = vmatpush1.msra.mxu0 0.0
        %1267 = vmatprep.subr.mxu0 0.0
        %1268 = vmatpush1.msra.mxu0 0.0
        %1269 = vmatprep.subr.mxu0 0.0
        %1270 = vmatpush1.msra.mxu0 0.0
        %1271 = vmatprep.subr.mxu0 0.0
        %1272 = vmatpush1.msra.mxu0 0.0
        %1273 = vmatprep.subr.mxu0 0.0
        %1274 = vmatpush1.msra.mxu0 0.0
        %1275 = vmatprep.subr.mxu0 0.0
        %1276 = vmatpush1.msra.mxu0 0.0
        %1277 = vmatprep.subr.mxu0 0.0
        %1278 = vmatpush1.msra.mxu0 0.0
        %1279 = vmatprep.subr.mxu0 0.0
        %1280 = vmatpush1.msra.mxu0 0.0
        %1281 = vmatprep.subr.mxu0 0.0
        %1282 = vmatpush1.msra.mxu0 0.0
        %1283 = vmatprep.subr.mxu0 0.0
        %1284 = vmatpush1.msra.mxu0 0.0
        %1285 = vmatprep.subr.mxu0 0.0
        %1286 = vmatpush1.msra.mxu0 0.0
        %1287 = vmatprep.subr.mxu0 0.0
        %1288 = vmatpush1.msra.mxu0 0.0
        %1289 = vmatprep.subr.mxu0 0.0
        %1290 = vmatpush1.msra.mxu0 0.0
        %1291 = vmatprep.subr.mxu0 0.0
        %1292 = vmatpush1.msra.mxu0 0.0
        %1293 = vmatprep.subr.mxu0 0.0
        %1294 = vmatpush1.msra.mxu0 0.0
        %1295 = vmatprep.subr.mxu0 0.0
        %1296 = vmatpush1.msra.mxu0 0.0
        %1297 = vmatprep.subr.mxu0 0.0
        %1298 = vmatpush1.msra.mxu0 0.0
        %1299 = vmatprep.mubr.f32.mxu0 0.0
        %v1300 = vand.u32 %v800, 4294901760
        %1301 = vmatmul.mubr.f32.gmra.mrb[0].mxu0 %v1300
        %v1302 = vpop.f32.mrb[0].mxu0
        %v1303 = vadd.f32 %v1197, %v1302
        %v1304 = vpop.f32.mrb[0].mxu0
        %1305 = vmatprep.mubr.f32.mxu0 0.0
        %v1306 = vand.u32 %v803, 4294901760
        %1307 = vmatmul.mubr.f32.gmra.mrb[0].mxu0 %v1306
        %v1308 = vpop.f32.mrb[0].mxu0
        %v1309 = vadd.f32 %v1205, %v1308
        %v1310 = vpop.f32.mrb[0].mxu0
        %1311 = vdwg.mxu0
        %1312 = vmatprep.subr.mxu0 0.0
        %v1313 = vand.u32 %v176, 4294901760
        %1314 = vmatpush1.msra.mxu0 %v1313
        %1315 = vmatprep.subr.mxu0 0.0
        %v1316 = vand.u32 %v177, 4294901760
        %1317 = vmatpush1.msra.mxu0 %v1316
        %1318 = vmatprep.subr.mxu0 0.0
        %v1319 = vand.u32 %v178, 4294901760
        %1320 = vmatpush1.msra.mxu0 %v1319
        %1321 = vmatprep.subr.mxu0 0.0
        %v1322 = vand.u32 %v179, 4294901760
        %1323 = vmatpush1.msra.mxu0 %v1322
        %1324 = vmatprep.subr.mxu0 0.0
        %v1325 = vand.u32 %v180, 4294901760
        %1326 = vmatpush1.msra.mxu0 %v1325
        %1327 = vmatprep.subr.mxu0 0.0
        %v1328 = vand.u32 %v181, 4294901760
        %1329 = vmatpush1.msra.mxu0 %v1328
        %1330 = vmatprep.subr.mxu0 0.0
        %v1331 = vand.u32 %v182, 4294901760
        %1332 = vmatpush1.msra.mxu0 %v1331
        %1333 = vmatprep.subr.mxu0 0.0
        %v1334 = vand.u32 %v183, 4294901760
        %1335 = vmatpush1.msra.mxu0 %v1334
        %1336 = vmatprep.subr.mxu0 0.0
        %v1337 = vand.u32 %v184, 4294901760
        %1338 = vmatpush1.msra.mxu0 %v1337
        %1339 = vmatprep.subr.mxu0 0.0
        %1340 = vmatpush1.msra.mxu0 0.0
        %1341 = vmatprep.subr.mxu0 0.0
        %1342 = vmatpush1.msra.mxu0 0.0
        %1343 = vmatprep.subr.mxu0 0.0
        %1344 = vmatpush1.msra.mxu0 0.0
        %1345 = vmatprep.subr.mxu0 0.0
        %1346 = vmatpush1.msra.mxu0 0.0
        %1347 = vmatprep.subr.mxu0 0.0
        %1348 = vmatpush1.msra.mxu0 0.0
        %1349 = vmatprep.subr.mxu0 0.0
        %1350 = vmatpush1.msra.mxu0 0.0
        %1351 = vmatprep.subr.mxu0 0.0
        %1352 = vmatpush1.msra.mxu0 0.0
        %1353 = vmatprep.subr.mxu0 0.0
        %1354 = vmatpush1.msra.mxu0 0.0
        %1355 = vmatprep.subr.mxu0 0.0
        %1356 = vmatpush1.msra.mxu0 0.0
        %1357 = vmatprep.subr.mxu0 0.0
        %1358 = vmatpush1.msra.mxu0 0.0
        %1359 = vmatprep.subr.mxu0 0.0
        %1360 = vmatpush1.msra.mxu0 0.0
        %1361 = vmatprep.subr.mxu0 0.0
        %1362 = vmatpush1.msra.mxu0 0.0
        %1363 = vmatprep.subr.mxu0 0.0
        %1364 = vmatpush1.msra.mxu0 0.0
        %1365 = vmatprep.subr.mxu0 0.0
        %1366 = vmatpush1.msra.mxu0 0.0
        %1367 = vmatprep.subr.mxu0 0.0
        %1368 = vmatpush1.msra.mxu0 0.0
        %1369 = vmatprep.subr.mxu0 0.0
        %1370 = vmatpush1.msra.mxu0 0.0
        %1371 = vmatprep.subr.mxu0 0.0
        %1372 = vmatpush1.msra.mxu0 0.0
        %1373 = vmatprep.subr.mxu0 0.0
        %1374 = vmatpush1.msra.mxu0 0.0
        %1375 = vmatprep.subr.mxu0 0.0
        %1376 = vmatpush1.msra.mxu0 0.0
        %1377 = vmatprep.subr.mxu0 0.0
        %1378 = vmatpush1.msra.mxu0 0.0
        %1379 = vmatprep.subr.mxu0 0.0
        %1380 = vmatpush1.msra.mxu0 0.0
        %1381 = vmatprep.subr.mxu0 0.0
        %1382 = vmatpush1.msra.mxu0 0.0
        %1383 = vmatprep.subr.mxu0 0.0
        %1384 = vmatpush1.msra.mxu0 0.0
        %1385 = vmatprep.mubr.f32.mxu0 0.0
        %v1386 = vand.u32 %v800, 4294901760
        %1387 = vmatmul.mubr.f32.gmra.mrb[0].mxu0 %v1386
        %v1388 = vpop.f32.mrb[0].mxu0
        %v1389 = vadd.f32 %v1303, %v1388
        %v1390 = vpop.f32.mrb[0].mxu0
        %1391 = vmatprep.mubr.f32.mxu0 0.0
        %v1392 = vand.u32 %v803, 4294901760
        %1393 = vmatmul.mubr.f32.gmra.mrb[0].mxu0 %v1392
        %v1394 = vpop.f32.mrb[0].mxu0
        %v1395 = vadd.f32 %v1309, %v1394
        %v1396 = vpop.f32.mrb[0].mxu0
        %1397 = vdwg.mxu0
        %s1398 = sadd.s32 %s172, 2
        %s1399 = scalar_lea.vmem %s170, %s1398
        %v1400 = vld [vmem:[%s1399] sm:$0xff]
        %v1401 = vld [vmem:[%s1399 + $0x8] sm:$0xff]
        %s1402 = scalar_lea.vmem [#allocation2], 144
        %v1403 = vld [vmem:[%s1402] sm:$0xff]
        %v1404 = vld [vmem:[%s1402 + $0x8] sm:$0xff]
        %v1405 = vld [vmem:[%s1402 + $0x10] sm:$0xff]
        %v1406 = vld [vmem:[%s1402 + $0x18] sm:$0xff]
        %v1407 = vld [vmem:[%s1402 + $0x20] sm:$0xff]
        %v1408 = vld [vmem:[%s1402 + $0x28] sm:$0xff]
        %v1409 = vld [vmem:[%s1402 + $0x30] sm:$0xff]
        %v1410 = vld [vmem:[%s1402 + $0x38] sm:$0xff]
        %v1411 = vld [vmem:[%s1402 + $0x40] sm:$0xff]
        %v1413 = vsel %vm199, %v1400, 0
        %v1416 = vsel %vm199, %v1401, 0
        %1418 = vmatprep.subr.mxu0 0.0
        %v1419 = vand.u32 %v1403, 4294901760
        %1420 = vmatpush1.msra.mxu0 %v1419
        %1421 = vmatprep.subr.mxu0 0.0
        %v1422 = vand.u32 %v1404, 4294901760
        %1423 = vmatpush1.msra.mxu0 %v1422
        %1424 = vmatprep.subr.mxu0 0.0
        %v1425 = vand.u32 %v1405, 4294901760
        %1426 = vmatpush1.msra.mxu0 %v1425
        %1427 = vmatprep.subr.mxu0 0.0
        %v1428 = vand.u32 %v1406, 4294901760
        %1429 = vmatpush1.msra.mxu0 %v1428
        %1430 = vmatprep.subr.mxu0 0.0
        %v1431 = vand.u32 %v1407, 4294901760
        %1432 = vmatpush1.msra.mxu0 %v1431
        %1433 = vmatprep.subr.mxu0 0.0
        %v1434 = vand.u32 %v1408, 4294901760
        %1435 = vmatpush1.msra.mxu0 %v1434
        %1436 = vmatprep.subr.mxu0 0.0
        %v1437 = vand.u32 %v1409, 4294901760
        %1438 = vmatpush1.msra.mxu0 %v1437
        %1439 = vmatprep.subr.mxu0 0.0
        %v1440 = vand.u32 %v1410, 4294901760
        %1441 = vmatpush1.msra.mxu0 %v1440
        %1442 = vmatprep.subr.mxu0 0.0
        %v1443 = vand.u32 %v1411, 4294901760
        %1444 = vmatpush1.msra.mxu0 %v1443
        %1445 = vmatprep.subr.mxu0 0.0
        %1446 = vmatpush1.msra.mxu0 0.0
        %1447 = vmatprep.subr.mxu0 0.0
        %1448 = vmatpush1.msra.mxu0 0.0
        %1449 = vmatprep.subr.mxu0 0.0
        %1450 = vmatpush1.msra.mxu0 0.0
        %1451 = vmatprep.subr.mxu0 0.0
        %1452 = vmatpush1.msra.mxu0 0.0
        %1453 = vmatprep.subr.mxu0 0.0
        %1454 = vmatpush1.msra.mxu0 0.0
        %1455 = vmatprep.subr.mxu0 0.0
        %1456 = vmatpush1.msra.mxu0 0.0
        %1457 = vmatprep.subr.mxu0 0.0
        %1458 = vmatpush1.msra.mxu0 0.0
        %1459 = vmatprep.subr.mxu0 0.0
        %1460 = vmatpush1.msra.mxu0 0.0
        %1461 = vmatprep.subr.mxu0 0.0
        %1462 = vmatpush1.msra.mxu0 0.0
        %1463 = vmatprep.subr.mxu0 0.0
        %1464 = vmatpush1.msra.mxu0 0.0
        %1465 = vmatprep.subr.mxu0 0.0
        %1466 = vmatpush1.msra.mxu0 0.0
        %1467 = vmatprep.subr.mxu0 0.0
        %1468 = vmatpush1.msra.mxu0 0.0
        %1469 = vmatprep.subr.mxu0 0.0
        %1470 = vmatpush1.msra.mxu0 0.0
        %1471 = vmatprep.subr.mxu0 0.0
        %1472 = vmatpush1.msra.mxu0 0.0
        %1473 = vmatprep.subr.mxu0 0.0
        %1474 = vmatpush1.msra.mxu0 0.0
        %1475 = vmatprep.subr.mxu0 0.0
        %1476 = vmatpush1.msra.mxu0 0.0
        %1477 = vmatprep.subr.mxu0 0.0
        %1478 = vmatpush1.msra.mxu0 0.0
        %1479 = vmatprep.subr.mxu0 0.0
        %1480 = vmatpush1.msra.mxu0 0.0
        %1481 = vmatprep.subr.mxu0 0.0
        %1482 = vmatpush1.msra.mxu0 0.0
        %1483 = vmatprep.subr.mxu0 0.0
        %1484 = vmatpush1.msra.mxu0 0.0
        %1485 = vmatprep.subr.mxu0 0.0
        %1486 = vmatpush1.msra.mxu0 0.0
        %1487 = vmatprep.subr.mxu0 0.0
        %1488 = vmatpush1.msra.mxu0 0.0
        %1489 = vmatprep.subr.mxu0 0.0
        %1490 = vmatpush1.msra.mxu0 0.0
        %1491 = vmatprep.mubr.f32.mxu0 0.0
        %v1492 = vand.u32 %v1413, 4294901760
        %v1493 = vsub.f32 %v1413, %v1492
        %v1494 = vand.u32 %v1493, 4294901760
        %v1495 = vsub.f32 %v1493, %v1494
        %v1496 = vand.u32 %v1495, 4294901760
        %1497 = vmatmul.mubr.f32.gmra.mrb[0].mxu0 %v1496
        %v1498 = vpop.f32.mrb[0].mxu0
        %v1499 = vadd.f32 0.0, %v1498
        %v1500 = vpop.f32.mrb[0].mxu0
        %1501 = vmatprep.mubr.f32.mxu0 0.0
        %v1502 = vand.u32 %v1416, 4294901760
        %v1503 = vsub.f32 %v1416, %v1502
        %v1504 = vand.u32 %v1503, 4294901760
        %v1505 = vsub.f32 %v1503, %v1504
        %v1506 = vand.u32 %v1505, 4294901760
        %1507 = vmatmul.mubr.f32.gmra.mrb[0].mxu0 %v1506
        %v1508 = vpop.f32.mrb[0].mxu0
        %v1509 = vadd.f32 0.0, %v1508
        %v1510 = vpop.f32.mrb[0].mxu0
        %1511 = vdwg.mxu0
        %1512 = vmatprep.subr.mxu0 0.0
        %v1513 = vand.u32 %v1403, 4294901760
        %v1514 = vsub.f32 %v1403, %v1513
        %v1515 = vand.u32 %v1514, 4294901760
        %v1516 = vsub.f32 %v1514, %v1515
        %v1517 = vand.u32 %v1516, 4294901760
        %1518 = vmatpush1.msra.mxu0 %v1517
        %1519 = vmatprep.subr.mxu0 0.0
        %v1520 = vand.u32 %v1404, 4294901760
        %v1521 = vsub.f32 %v1404, %v1520
        %v1522 = vand.u32 %v1521, 4294901760
        %v1523 = vsub.f32 %v1521, %v1522
        %v1524 = vand.u32 %v1523, 4294901760
        %1525 = vmatpush1.msra.mxu0 %v1524
        %1526 = vmatprep.subr.mxu0 0.0
        %v1527 = vand.u32 %v1405, 4294901760
        %v1528 = vsub.f32 %v1405, %v1527
        %v1529 = vand.u32 %v1528, 4294901760
        %v1530 = vsub.f32 %v1528, %v1529
        %v1531 = vand.u32 %v1530, 4294901760
        %1532 = vmatpush1.msra.mxu0 %v1531
        %1533 = vmatprep.subr.mxu0 0.0
        %v1534 = vand.u32 %v1406, 4294901760
        %v1535 = vsub.f32 %v1406, %v1534
        %v1536 = vand.u32 %v1535, 4294901760
        %v1537 = vsub.f32 %v1535, %v1536
        %v1538 = vand.u32 %v1537, 4294901760
        %1539 = vmatpush1.msra.mxu0 %v1538
        %1540 = vmatprep.subr.mxu0 0.0
        %v1541 = vand.u32 %v1407, 4294901760
        %v1542 = vsub.f32 %v1407, %v1541
        %v1543 = vand.u32 %v1542, 4294901760
        %v1544 = vsub.f32 %v1542, %v1543
        %v1545 = vand.u32 %v1544, 4294901760
        %1546 = vmatpush1.msra.mxu0 %v1545
        %1547 = vmatprep.subr.mxu0 0.0
        %v1548 = vand.u32 %v1408, 4294901760
        %v1549 = vsub.f32 %v1408, %v1548
        %v1550 = vand.u32 %v1549, 4294901760
        %v1551 = vsub.f32 %v1549, %v1550
        %v1552 = vand.u32 %v1551, 4294901760
        %1553 = vmatpush1.msra.mxu0 %v1552
        %1554 = vmatprep.subr.mxu0 0.0
        %v1555 = vand.u32 %v1409, 4294901760
        %v1556 = vsub.f32 %v1409, %v1555
        %v1557 = vand.u32 %v1556, 4294901760
        %v1558 = vsub.f32 %v1556, %v1557
        %v1559 = vand.u32 %v1558, 4294901760
        %1560 = vmatpush1.msra.mxu0 %v1559
        %1561 = vmatprep.subr.mxu0 0.0
        %v1562 = vand.u32 %v1410, 4294901760
        %v1563 = vsub.f32 %v1410, %v1562
        %v1564 = vand.u32 %v1563, 4294901760
        %v1565 = vsub.f32 %v1563, %v1564
        %v1566 = vand.u32 %v1565, 4294901760
        %1567 = vmatpush1.msra.mxu0 %v1566
        %1568 = vmatprep.subr.mxu0 0.0
        %v1569 = vand.u32 %v1411, 4294901760
        %v1570 = vsub.f32 %v1411, %v1569
        %v1571 = vand.u32 %v1570, 4294901760
        %v1572 = vsub.f32 %v1570, %v1571
        %v1573 = vand.u32 %v1572, 4294901760
        %1574 = vmatpush1.msra.mxu0 %v1573
        %1575 = vmatprep.subr.mxu0 0.0
        %1576 = vmatpush1.msra.mxu0 0.0
        %1577 = vmatprep.subr.mxu0 0.0
        %1578 = vmatpush1.msra.mxu0 0.0
        %1579 = vmatprep.subr.mxu0 0.0
        %1580 = vmatpush1.msra.mxu0 0.0
        %1581 = vmatprep.subr.mxu0 0.0
        %1582 = vmatpush1.msra.mxu0 0.0
        %1583 = vmatprep.subr.mxu0 0.0
        %1584 = vmatpush1.msra.mxu0 0.0
        %1585 = vmatprep.subr.mxu0 0.0
        %1586 = vmatpush1.msra.mxu0 0.0
        %1587 = vmatprep.subr.mxu0 0.0
        %1588 = vmatpush1.msra.mxu0 0.0
        %1589 = vmatprep.subr.mxu0 0.0
        %1590 = vmatpush1.msra.mxu0 0.0
        %1591 = vmatprep.subr.mxu0 0.0
        %1592 = vmatpush1.msra.mxu0 0.0
        %1593 = vmatprep.subr.mxu0 0.0
        %1594 = vmatpush1.msra.mxu0 0.0
        %1595 = vmatprep.subr.mxu0 0.0
        %1596 = vmatpush1.msra.mxu0 0.0
        %1597 = vmatprep.subr.mxu0 0.0
        %1598 = vmatpush1.msra.mxu0 0.0
        %1599 = vmatprep.subr.mxu0 0.0
        %1600 = vmatpush1.msra.mxu0 0.0
        %1601 = vmatprep.subr.mxu0 0.0
        %1602 = vmatpush1.msra.mxu0 0.0
        %1603 = vmatprep.subr.mxu0 0.0
        %1604 = vmatpush1.msra.mxu0 0.0
        %1605 = vmatprep.subr.mxu0 0.0
        %1606 = vmatpush1.msra.mxu0 0.0
        %1607 = vmatprep.subr.mxu0 0.0
        %1608 = vmatpush1.msra.mxu0 0.0
        %1609 = vmatprep.subr.mxu0 0.0
        %1610 = vmatpush1.msra.mxu0 0.0
        %1611 = vmatprep.subr.mxu0 0.0
        %1612 = vmatpush1.msra.mxu0 0.0
        %1613 = vmatprep.subr.mxu0 0.0
        %1614 = vmatpush1.msra.mxu0 0.0
        %1615 = vmatprep.subr.mxu0 0.0
        %1616 = vmatpush1.msra.mxu0 0.0
        %1617 = vmatprep.subr.mxu0 0.0
        %1618 = vmatpush1.msra.mxu0 0.0
        %1619 = vmatprep.subr.mxu0 0.0
        %1620 = vmatpush1.msra.mxu0 0.0
        %1621 = vmatprep.mubr.f32.mxu0 0.0
        %v1622 = vand.u32 %v1413, 4294901760
        %1623 = vmatmul.mubr.f32.gmra.mrb[0].mxu0 %v1622
        %v1624 = vpop.f32.mrb[0].mxu0
        %v1625 = vadd.f32 %v1499, %v1624
        %v1626 = vpop.f32.mrb[0].mxu0
        %1627 = vmatprep.mubr.f32.mxu0 0.0
        %v1628 = vand.u32 %v1416, 4294901760
        %1629 = vmatmul.mubr.f32.gmra.mrb[0].mxu0 %v1628
        %v1630 = vpop.f32.mrb[0].mxu0
        %v1631 = vadd.f32 %v1509, %v1630
        %v1632 = vpop.f32.mrb[0].mxu0
        %1633 = vdwg.mxu0
        %1634 = vmatprep.subr.mxu0 0.0
        %v1635 = vand.u32 %v1403, 4294901760
        %v1636 = vsub.f32 %v1403, %v1635
        %1637 = vmatpush1.msra.mxu0 %v1636
        %1638 = vmatprep.subr.mxu0 0.0
        %v1639 = vand.u32 %v1404, 4294901760
        %v1640 = vsub.f32 %v1404, %v1639
        %1641 = vmatpush1.msra.mxu0 %v1640
        %1642 = vmatprep.subr.mxu0 0.0
        %v1643 = vand.u32 %v1405, 4294901760
        %v1644 = vsub.f32 %v1405, %v1643
        %1645 = vmatpush1.msra.mxu0 %v1644
        %1646 = vmatprep.subr.mxu0 0.0
        %v1647 = vand.u32 %v1406, 4294901760
        %v1648 = vsub.f32 %v1406, %v1647
        %1649 = vmatpush1.msra.mxu0 %v1648
        %1650 = vmatprep.subr.mxu0 0.0
        %v1651 = vand.u32 %v1407, 4294901760
        %v1652 = vsub.f32 %v1407, %v1651
        %1653 = vmatpush1.msra.mxu0 %v1652
        %1654 = vmatprep.subr.mxu0 0.0
        %v1655 = vand.u32 %v1408, 4294901760
        %v1656 = vsub.f32 %v1408, %v1655
        %1657 = vmatpush1.msra.mxu0 %v1656
        %1658 = vmatprep.subr.mxu0 0.0
        %v1659 = vand.u32 %v1409, 4294901760
        %v1660 = vsub.f32 %v1409, %v1659
        %1661 = vmatpush1.msra.mxu0 %v1660
        %1662 = vmatprep.subr.mxu0 0.0
        %v1663 = vand.u32 %v1410, 4294901760
        %v1664 = vsub.f32 %v1410, %v1663
        %1665 = vmatpush1.msra.mxu0 %v1664
        %1666 = vmatprep.subr.mxu0 0.0
        %v1667 = vand.u32 %v1411, 4294901760
        %v1668 = vsub.f32 %v1411, %v1667
        %1669 = vmatpush1.msra.mxu0 %v1668
        %1670 = vmatprep.subr.mxu0 0.0
        %1671 = vmatpush1.msra.mxu0 0.0
        %1672 = vmatprep.subr.mxu0 0.0
        %1673 = vmatpush1.msra.mxu0 0.0
        %1674 = vmatprep.subr.mxu0 0.0
        %1675 = vmatpush1.msra.mxu0 0.0
        %1676 = vmatprep.subr.mxu0 0.0
        %1677 = vmatpush1.msra.mxu0 0.0
        %1678 = vmatprep.subr.mxu0 0.0
        %1679 = vmatpush1.msra.mxu0 0.0
        %1680 = vmatprep.subr.mxu0 0.0
        %1681 = vmatpush1.msra.mxu0 0.0
        %1682 = vmatprep.subr.mxu0 0.0
        %1683 = vmatpush1.msra.mxu0 0.0
        %1684 = vmatprep.subr.mxu0 0.0
        %1685 = vmatpush1.msra.mxu0 0.0
        %1686 = vmatprep.subr.mxu0 0.0
        %1687 = vmatpush1.msra.mxu0 0.0
        %1688 = vmatprep.subr.mxu0 0.0
        %1689 = vmatpush1.msra.mxu0 0.0
        %1690 = vmatprep.subr.mxu0 0.0
        %1691 = vmatpush1.msra.mxu0 0.0
        %1692 = vmatprep.subr.mxu0 0.0
        %1693 = vmatpush1.msra.mxu0 0.0
        %1694 = vmatprep.subr.mxu0 0.0
        %1695 = vmatpush1.msra.mxu0 0.0
        %1696 = vmatprep.subr.mxu0 0.0
        %1697 = vmatpush1.msra.mxu0 0.0
        %1698 = vmatprep.subr.mxu0 0.0
        %1699 = vmatpush1.msra.mxu0 0.0
        %1700 = vmatprep.subr.mxu0 0.0
        %1701 = vmatpush1.msra.mxu0 0.0
        %1702 = vmatprep.subr.mxu0 0.0
        %1703 = vmatpush1.msra.mxu0 0.0
        %1704 = vmatprep.subr.mxu0 0.0
        %1705 = vmatpush1.msra.mxu0 0.0
        %1706 = vmatprep.subr.mxu0 0.0
        %1707 = vmatpush1.msra.mxu0 0.0
        %1708 = vmatprep.subr.mxu0 0.0
        %1709 = vmatpush1.msra.mxu0 0.0
        %1710 = vmatprep.subr.mxu0 0.0
        %1711 = vmatpush1.msra.mxu0 0.0
        %1712 = vmatprep.subr.mxu0 0.0
        %1713 = vmatpush1.msra.mxu0 0.0
        %1714 = vmatprep.subr.mxu0 0.0
        %1715 = vmatpush1.msra.mxu0 0.0
        %1716 = vmatprep.mubr.f32.mxu0 0.0
        %v1717 = vand.u32 %v1413, 4294901760
        %v1718 = vsub.f32 %v1413, %v1717
        %1719 = vmatmul.mubr.f32.gmra.mrb[0].mxu0 %v1718
        %v1720 = vpop.f32.mrb[0].mxu0
        %v1721 = vadd.f32 %v1625, %v1720
        %v1722 = vpop.f32.mrb[0].mxu0
        %1723 = vmatprep.mubr.f32.mxu0 0.0
        %v1724 = vand.u32 %v1416, 4294901760
        %v1725 = vsub.f32 %v1416, %v1724
        %1726 = vmatmul.mubr.f32.gmra.mrb[0].mxu0 %v1725
        %v1727 = vpop.f32.mrb[0].mxu0
        %v1728 = vadd.f32 %v1631, %v1727
        %v1729 = vpop.f32.mrb[0].mxu0
        %1730 = vdwg.mxu0
        %1731 = vmatprep.subr.mxu0 0.0
        %v1732 = vand.u32 %v1403, 4294901760
        %1733 = vmatpush1.msra.mxu0 %v1732
        %1734 = vmatprep.subr.mxu0 0.0
        %v1735 = vand.u32 %v1404, 4294901760
        %1736 = vmatpush1.msra.mxu0 %v1735
        %1737 = vmatprep.subr.mxu0 0.0
        %v1738 = vand.u32 %v1405, 4294901760
        %1739 = vmatpush1.msra.mxu0 %v1738
        %1740 = vmatprep.subr.mxu0 0.0
        %v1741 = vand.u32 %v1406, 4294901760
        %1742 = vmatpush1.msra.mxu0 %v1741
        %1743 = vmatprep.subr.mxu0 0.0
        %v1744 = vand.u32 %v1407, 4294901760
        %1745 = vmatpush1.msra.mxu0 %v1744
        %1746 = vmatprep.subr.mxu0 0.0
        %v1747 = vand.u32 %v1408, 4294901760
        %1748 = vmatpush1.msra.mxu0 %v1747
        %1749 = vmatprep.subr.mxu0 0.0
        %v1750 = vand.u32 %v1409, 4294901760
        %1751 = vmatpush1.msra.mxu0 %v1750
        %1752 = vmatprep.subr.mxu0 0.0
        %v1753 = vand.u32 %v1410, 4294901760
        %1754 = vmatpush1.msra.mxu0 %v1753
        %1755 = vmatprep.subr.mxu0 0.0
        %v1756 = vand.u32 %v1411, 4294901760
        %1757 = vmatpush1.msra.mxu0 %v1756
        %1758 = vmatprep.subr.mxu0 0.0
        %1759 = vmatpush1.msra.mxu0 0.0
        %1760 = vmatprep.subr.mxu0 0.0
        %1761 = vmatpush1.msra.mxu0 0.0
        %1762 = vmatprep.subr.mxu0 0.0
        %1763 = vmatpush1.msra.mxu0 0.0
        %1764 = vmatprep.subr.mxu0 0.0
        %1765 = vmatpush1.msra.mxu0 0.0
        %1766 = vmatprep.subr.mxu0 0.0
        %1767 = vmatpush1.msra.mxu0 0.0
        %1768 = vmatprep.subr.mxu0 0.0
        %1769 = vmatpush1.msra.mxu0 0.0
        %1770 = vmatprep.subr.mxu0 0.0
        %1771 = vmatpush1.msra.mxu0 0.0
        %1772 = vmatprep.subr.mxu0 0.0
        %1773 = vmatpush1.msra.mxu0 0.0
        %1774 = vmatprep.subr.mxu0 0.0
        %1775 = vmatpush1.msra.mxu0 0.0
        %1776 = vmatprep.subr.mxu0 0.0
        %1777 = vmatpush1.msra.mxu0 0.0
        %1778 = vmatprep.subr.mxu0 0.0
        %1779 = vmatpush1.msra.mxu0 0.0
        %1780 = vmatprep.subr.mxu0 0.0
        %1781 = vmatpush1.msra.mxu0 0.0
        %1782 = vmatprep.subr.mxu0 0.0
        %1783 = vmatpush1.msra.mxu0 0.0
        %1784 = vmatprep.subr.mxu0 0.0
        %1785 = vmatpush1.msra.mxu0 0.0
        %1786 = vmatprep.subr.mxu0 0.0
        %1787 = vmatpush1.msra.mxu0 0.0
        %1788 = vmatprep.subr.mxu0 0.0
        %1789 = vmatpush1.msra.mxu0 0.0
        %1790 = vmatprep.subr.mxu0 0.0
        %1791 = vmatpush1.msra.mxu0 0.0
        %1792 = vmatprep.subr.mxu0 0.0
        %1793 = vmatpush1.msra.mxu0 0.0
        %1794 = vmatprep.subr.mxu0 0.0
        %1795 = vmatpush1.msra.mxu0 0.0
        %1796 = vmatprep.subr.mxu0 0.0
        %1797 = vmatpush1.msra.mxu0 0.0
        %1798 = vmatprep.subr.mxu0 0.0
        %1799 = vmatpush1.msra.mxu0 0.0
        %1800 = vmatprep.subr.mxu0 0.0
        %1801 = vmatpush1.msra.mxu0 0.0
        %1802 = vmatprep.subr.mxu0 0.0
        %1803 = vmatpush1.msra.mxu0 0.0
        %1804 = vmatprep.mubr.f32.mxu0 0.0
        %v1805 = vand.u32 %v1413, 4294901760
        %v1806 = vsub.f32 %v1413, %v1805
        %v1807 = vand.u32 %v1806, 4294901760
        %1808 = vmatmul.mubr.f32.gmra.mrb[0].mxu0 %v1807
        %v1809 = vpop.f32.mrb[0].mxu0
        %v1810 = vadd.f32 %v1721, %v1809
        %v1811 = vpop.f32.mrb[0].mxu0
        %1812 = vmatprep.mubr.f32.mxu0 0.0
        %v1813 = vand.u32 %v1416, 4294901760
        %v1814 = vsub.f32 %v1416, %v1813
        %v1815 = vand.u32 %v1814, 4294901760
        %1816 = vmatmul.mubr.f32.gmra.mrb[0].mxu0 %v1815
        %v1817 = vpop.f32.mrb[0].mxu0
        %v1818 = vadd.f32 %v1728, %v1817
        %v1819 = vpop.f32.mrb[0].mxu0
        %1820 = vdwg.mxu0
        %1821 = vmatprep.subr.mxu0 0.0
        %v1822 = vand.u32 %v1403, 4294901760
        %v1823 = vsub.f32 %v1403, %v1822
        %v1824 = vand.u32 %v1823, 4294901760
        %1825 = vmatpush1.msra.mxu0 %v1824
        %1826 = vmatprep.subr.mxu0 0.0
        %v1827 = vand.u32 %v1404, 4294901760
        %v1828 = vsub.f32 %v1404, %v1827
        %v1829 = vand.u32 %v1828, 4294901760
        %1830 = vmatpush1.msra.mxu0 %v1829
        %1831 = vmatprep.subr.mxu0 0.0
        %v1832 = vand.u32 %v1405, 4294901760
        %v1833 = vsub.f32 %v1405, %v1832
        %v1834 = vand.u32 %v1833, 4294901760
        %1835 = vmatpush1.msra.mxu0 %v1834
        %1836 = vmatprep.subr.mxu0 0.0
        %v1837 = vand.u32 %v1406, 4294901760
        %v1838 = vsub.f32 %v1406, %v1837
        %v1839 = vand.u32 %v1838, 4294901760
        %1840 = vmatpush1.msra.mxu0 %v1839
        %1841 = vmatprep.subr.mxu0 0.0
        %v1842 = vand.u32 %v1407, 4294901760
        %v1843 = vsub.f32 %v1407, %v1842
        %v1844 = vand.u32 %v1843, 4294901760
        %1845 = vmatpush1.msra.mxu0 %v1844
        %1846 = vmatprep.subr.mxu0 0.0
        %v1847 = vand.u32 %v1408, 4294901760
        %v1848 = vsub.f32 %v1408, %v1847
        %v1849 = vand.u32 %v1848, 4294901760
        %1850 = vmatpush1.msra.mxu0 %v1849
        %1851 = vmatprep.subr.mxu0 0.0
        %v1852 = vand.u32 %v1409, 4294901760
        %v1853 = vsub.f32 %v1409, %v1852
        %v1854 = vand.u32 %v1853, 4294901760
        %1855 = vmatpush1.msra.mxu0 %v1854
        %1856 = vmatprep.subr.mxu0 0.0
        %v1857 = vand.u32 %v1410, 4294901760
        %v1858 = vsub.f32 %v1410, %v1857
        %v1859 = vand.u32 %v1858, 4294901760
        %1860 = vmatpush1.msra.mxu0 %v1859
        %1861 = vmatprep.subr.mxu0 0.0
        %v1862 = vand.u32 %v1411, 4294901760
        %v1863 = vsub.f32 %v1411, %v1862
        %v1864 = vand.u32 %v1863, 4294901760
        %1865 = vmatpush1.msra.mxu0 %v1864
        %1866 = vmatprep.subr.mxu0 0.0
        %1867 = vmatpush1.msra.mxu0 0.0
        %1868 = vmatprep.subr.mxu0 0.0
        %1869 = vmatpush1.msra.mxu0 0.0
        %1870 = vmatprep.subr.mxu0 0.0
        %1871 = vmatpush1.msra.mxu0 0.0
        %1872 = vmatprep.subr.mxu0 0.0
        %1873 = vmatpush1.msra.mxu0 0.0
        %1874 = vmatprep.subr.mxu0 0.0
        %1875 = vmatpush1.msra.mxu0 0.0
        %1876 = vmatprep.subr.mxu0 0.0
        %1877 = vmatpush1.msra.mxu0 0.0
        %1878 = vmatprep.subr.mxu0 0.0
        %1879 = vmatpush1.msra.mxu0 0.0
        %1880 = vmatprep.subr.mxu0 0.0
        %1881 = vmatpush1.msra.mxu0 0.0
        %1882 = vmatprep.subr.mxu0 0.0
        %1883 = vmatpush1.msra.mxu0 0.0
        %1884 = vmatprep.subr.mxu0 0.0
        %1885 = vmatpush1.msra.mxu0 0.0
        %1886 = vmatprep.subr.mxu0 0.0
        %1887 = vmatpush1.msra.mxu0 0.0
        %1888 = vmatprep.subr.mxu0 0.0
        %1889 = vmatpush1.msra.mxu0 0.0
        %1890 = vmatprep.subr.mxu0 0.0
        %1891 = vmatpush1.msra.mxu0 0.0
        %1892 = vmatprep.subr.mxu0 0.0
        %1893 = vmatpush1.msra.mxu0 0.0
        %1894 = vmatprep.subr.mxu0 0.0
        %1895 = vmatpush1.msra.mxu0 0.0
        %1896 = vmatprep.subr.mxu0 0.0
        %1897 = vmatpush1.msra.mxu0 0.0
        %1898 = vmatprep.subr.mxu0 0.0
        %1899 = vmatpush1.msra.mxu0 0.0
        %1900 = vmatprep.subr.mxu0 0.0
        %1901 = vmatpush1.msra.mxu0 0.0
        %1902 = vmatprep.subr.mxu0 0.0
        %1903 = vmatpush1.msra.mxu0 0.0
        %1904 = vmatprep.subr.mxu0 0.0
        %1905 = vmatpush1.msra.mxu0 0.0
        %1906 = vmatprep.subr.mxu0 0.0
        %1907 = vmatpush1.msra.mxu0 0.0
        %1908 = vmatprep.subr.mxu0 0.0
        %1909 = vmatpush1.msra.mxu0 0.0
        %1910 = vmatprep.subr.mxu0 0.0
        %1911 = vmatpush1.msra.mxu0 0.0
        %1912 = vmatprep.mubr.f32.mxu0 0.0
        %v1913 = vand.u32 %v1413, 4294901760
        %1914 = vmatmul.mubr.f32.gmra.mrb[0].mxu0 %v1913
        %v1915 = vpop.f32.mrb[0].mxu0
        %v1916 = vadd.f32 %v1810, %v1915
        %v1917 = vpop.f32.mrb[0].mxu0
        %1918 = vmatprep.mubr.f32.mxu0 0.0
        %v1919 = vand.u32 %v1416, 4294901760
        %1920 = vmatmul.mubr.f32.gmra.mrb[0].mxu0 %v1919
        %v1921 = vpop.f32.mrb[0].mxu0
        %v1922 = vadd.f32 %v1818, %v1921
        %v1923 = vpop.f32.mrb[0].mxu0
        %1924 = vdwg.mxu0
        %1925 = vmatprep.subr.mxu0 0.0
        %v1926 = vand.u32 %v1403, 4294901760
        %1927 = vmatpush1.msra.mxu0 %v1926
        %1928 = vmatprep.subr.mxu0 0.0
        %v1929 = vand.u32 %v1404, 4294901760
        %1930 = vmatpush1.msra.mxu0 %v1929
        %1931 = vmatprep.subr.mxu0 0.0
        %v1932 = vand.u32 %v1405, 4294901760
        %1933 = vmatpush1.msra.mxu0 %v1932
        %1934 = vmatprep.subr.mxu0 0.0
        %v1935 = vand.u32 %v1406, 4294901760
        %1936 = vmatpush1.msra.mxu0 %v1935
        %1937 = vmatprep.subr.mxu0 0.0
        %v1938 = vand.u32 %v1407, 4294901760
        %1939 = vmatpush1.msra.mxu0 %v1938
        %1940 = vmatprep.subr.mxu0 0.0
        %v1941 = vand.u32 %v1408, 4294901760
        %1942 = vmatpush1.msra.mxu0 %v1941
        %1943 = vmatprep.subr.mxu0 0.0
        %v1944 = vand.u32 %v1409, 4294901760
        %1945 = vmatpush1.msra.mxu0 %v1944
        %1946 = vmatprep.subr.mxu0 0.0
        %v1947 = vand.u32 %v1410, 4294901760
        %1948 = vmatpush1.msra.mxu0 %v1947
        %1949 = vmatprep.subr.mxu0 0.0
        %v1950 = vand.u32 %v1411, 4294901760
        %1951 = vmatpush1.msra.mxu0 %v1950
        %1952 = vmatprep.subr.mxu0 0.0
        %1953 = vmatpush1.msra.mxu0 0.0
        %1954 = vmatprep.subr.mxu0 0.0
        %1955 = vmatpush1.msra.mxu0 0.0
        %1956 = vmatprep.subr.mxu0 0.0
        %1957 = vmatpush1.msra.mxu0 0.0
        %1958 = vmatprep.subr.mxu0 0.0
        %1959 = vmatpush1.msra.mxu0 0.0
        %1960 = vmatprep.subr.mxu0 0.0
        %1961 = vmatpush1.msra.mxu0 0.0
        %1962 = vmatprep.subr.mxu0 0.0
        %1963 = vmatpush1.msra.mxu0 0.0
        %1964 = vmatprep.subr.mxu0 0.0
        %1965 = vmatpush1.msra.mxu0 0.0
        %1966 = vmatprep.subr.mxu0 0.0
        %1967 = vmatpush1.msra.mxu0 0.0
        %1968 = vmatprep.subr.mxu0 0.0
        %1969 = vmatpush1.msra.mxu0 0.0
        %1970 = vmatprep.subr.mxu0 0.0
        %1971 = vmatpush1.msra.mxu0 0.0
        %1972 = vmatprep.subr.mxu0 0.0
        %1973 = vmatpush1.msra.mxu0 0.0
        %1974 = vmatprep.subr.mxu0 0.0
        %1975 = vmatpush1.msra.mxu0 0.0
        %1976 = vmatprep.subr.mxu0 0.0
        %1977 = vmatpush1.msra.mxu0 0.0
        %1978 = vmatprep.subr.mxu0 0.0
        %1979 = vmatpush1.msra.mxu0 0.0
        %1980 = vmatprep.subr.mxu0 0.0
        %1981 = vmatpush1.msra.mxu0 0.0
        %1982 = vmatprep.subr.mxu0 0.0
        %1983 = vmatpush1.msra.mxu0 0.0
        %1984 = vmatprep.subr.mxu0 0.0
        %1985 = vmatpush1.msra.mxu0 0.0
        %1986 = vmatprep.subr.mxu0 0.0
        %1987 = vmatpush1.msra.mxu0 0.0
        %1988 = vmatprep.subr.mxu0 0.0
        %1989 = vmatpush1.msra.mxu0 0.0
        %1990 = vmatprep.subr.mxu0 0.0
        %1991 = vmatpush1.msra.mxu0 0.0
        %1992 = vmatprep.subr.mxu0 0.0
        %1993 = vmatpush1.msra.mxu0 0.0
        %1994 = vmatprep.subr.mxu0 0.0
        %1995 = vmatpush1.msra.mxu0 0.0
        %1996 = vmatprep.subr.mxu0 0.0
        %1997 = vmatpush1.msra.mxu0 0.0
        %1998 = vmatprep.mubr.f32.mxu0 0.0
        %v1999 = vand.u32 %v1413, 4294901760
        %2000 = vmatmul.mubr.f32.gmra.mrb[0].mxu0 %v1999
        %v2001 = vpop.f32.mrb[0].mxu0
        %v2002 = vadd.f32 %v1916, %v2001
        %v2003 = vpop.f32.mrb[0].mxu0
        %2004 = vmatprep.mubr.f32.mxu0 0.0
        %v2005 = vand.u32 %v1416, 4294901760
        %2006 = vmatmul.mubr.f32.gmra.mrb[0].mxu0 %v2005
        %v2007 = vpop.f32.mrb[0].mxu0
        %v2008 = vadd.f32 %v1922, %v2007
        %v2009 = vpop.f32.mrb[0].mxu0
        %2010 = vdwg.mxu0
        %v2011 = vadd.f32 %v1389, %v2002
        %v2012 = vadd.f32 %v1395, %v2008
        %2013 = vst [vmem:[%s165] sm:$0xff] %v2011
        %2014 = vst [vmem:[%s165 + $0x8] sm:$0xff] %v2012
        %s2015 = sand.u32 %s86, 1
        %s2016 = scalar_lea.sflag [#allocation4], %s2015
        %s2017 = sand.u32 %s86, 1
        %s2018 = smul.addr %s2017, 16
        %s2019 = scalar_lea.vmem [#allocation5], %s2018
        // Predicated region
        $region33: #{tpu_custom_call.1} parent=27 // pred_check
          %p2020 = pneg %p96
        $region34: #{tpu_custom_call.1} parent=27 // pred_check_branch
          %2022 = sbr.rel (%p2020) target = $region36
        $region35: #{tpu_custom_call.1} parent=27 // pred_region
          %s2023 = smul.u32 2, %s22
          %s2025 = ssub.s32 256, 256
          %2026 = vsyncadd %s2016, %s2025
          %s2027 = smul.addr %s21, 2
          %s2028 = sadd.s32 %s2023, %s2027
          %s2029 = smul.addr %s2028, 128
          %s2030 = scalar_lea.hbm %s2, %s2029
          %s2031 = sshll.u32 %s2019, 4
          %s2032 = int_to_ptr.vmem [resolvable:$true] %s2031
          %2037 = dma.vmem_to_hbm [thread:$0]  %s2032, 256, %s2030, %s2016, 128, 128, 8
        $region36: #{tpu_custom_call.1} parent=27 // pred_fallthru
          _
      $region28: #{tpu_custom_call.1} parent=5 // pred_fallthru
        _
      %p2038 = scmp.le.s32.totalorder 2, %s12
      // Predicated region
      $region37: #{tpu_custom_call.1} parent=5 // pred_check
        %p2039 = pneg %p2038
      $region38: #{tpu_custom_call.1} parent=5 // pred_check_branch
        %2041 = sbr.rel (%p2039) target = $region40
      $region39: #{tpu_custom_call.1} parent=5 // pred_region
        %s2042 = ssub.s32 %s12, 2
        // Predicated region
        $region41: #{tpu_custom_call.1} parent=39 // pred_check
          %p2043 = pneg %p102
        $region42: #{tpu_custom_call.1} parent=39 // pred_check_branch
          %2045 = sbr.rel (%p2043) target = $region44
        $region43: #{tpu_custom_call.1} parent=39 // pred_region
          %s2046 = sand.u32 %s87, 1
          %s2047 = scalar_lea.sflag [#allocation4], %s2046
          %s2048 = sand.u32 %s87, 1
          %s2049 = smul.addr %s2048, 16
          %s2050 = scalar_lea.vmem [#allocation5], %s2049
          %2051 = dma.done %s2047, 256
        $region44: #{tpu_custom_call.1} parent=39 // pred_fallthru
          _
      $region40: #{tpu_custom_call.1} parent=5 // pred_fallthru
        _
    $region6: #{tpu_custom_call.1} parent=1 // loop_footer
      %s16 = sadd.s32 1, %s12
    $region7: #{tpu_custom_call.1} parent=1 // loop_footer_branch
      %11 = sbr.rel target = $region3
    $region8: #{tpu_custom_call.1} parent=1 // loop_exit
      _
    %2052 = vsyncpa [#allocation3], 1
    %s2053 = scalar_lea.sflag [#allocation3], 1
    %2054 = vsyncpa %s2053, 1
    %2055 = vsyncpa [#allocation4], 1
    %s2056 = scalar_lea.sflag [#allocation4], 1
    %2057 = vsyncpa %s2056, 1

</llo_original>
